<compile_context>
chip_gen: v7x
topology: tpu7x:2x2x1
jax: 0.10.0
libtpu: 0.0.40
codegen_flags: <defaults>
</compile_context>

<pallas_src>
import functools
import math

import jax
import jax.numpy as jnp
from jax.experimental import pallas as pl
from jax.experimental.pallas import tpu as pltpu


def _round_up(x, m):
    return ((x + m - 1) // m) * m


def _knode_kernel(node_ref, knode_ref,
                  wq_ref, bq_ref, wkv_ref, bkv_ref, wo_ref, bo_ref,
                  wk1_ref, bk1_ref, wk2_ref, bk2_ref,
                  wg1_ref, bg1_ref, wg2_ref, bg2_ref,
                  pred_ref, attnw_ref,
                  *, num_heads, head_dim):
    f32 = jnp.float32
    node = node_ref[...]                       # (bb, Nq, E)  compute dtype
    knode = knode_ref[...]                     # (bb, Nk, E)
    bb, nq, e = node.shape
    nk = knode.shape[1]
    H, hd = num_heads, head_dim
    mmdt = node.dtype                          # matmul operand dtype
    m = bb * nq

    node2d = node.reshape(m, e)                # (M, E)
    knode2d = knode.reshape(bb * nk, e)        # (Mk, E)

    # ---- projections: full-width Q and fused K|V (one MXU launch each) ------
    # wq/bq are pre-scaled by 1/sqrt(hd); alpha is folded into wkv.
    q2d = jnp.dot(node2d, wq_ref[...], preferred_element_type=f32) + bq_ref[...]
    kv2d = jnp.dot(knode2d, wkv_ref[...], preferred_element_type=f32) + bkv_ref[...]

    q3 = q2d.astype(mmdt).reshape(bb, nq, e)               # (bb, Nq, E)
    k3 = kv2d[:, :e].astype(mmdt).reshape(bb, nk, e)        # (bb, Nk, E)
    v3 = kv2d[:, e:].astype(mmdt).reshape(bb, nk, e)        # (bb, Nk, E)

    # ---- attention: fully batched over the batch block, static head loop ----
    attnw_sum = jnp.zeros((bb, nq, nk), f32)
    ctx_heads = []
    for h in range(H):                         # static; per-head lane slices
        sl = slice(h * hd, (h + 1) * hd)
        s = jnp.einsum('bqd,bkd->bqk', q3[:, :, sl], k3[:, :, sl],
                       preferred_element_type=f32)           # (bb, Nq, Nk)
        s = s - jnp.max(s, axis=-1, keepdims=True)
        p = jnp.exp(s)
        p = p / jnp.sum(p, axis=-1, keepdims=True)            # exact softmax
        attnw_sum = attnw_sum + p
        ctx_heads.append(
            jnp.einsum('bqk,bkd->bqd', p.astype(mmdt), v3[:, :, sl],
                       preferred_element_type=f32).astype(mmdt))

    # Head concat along lanes, then ONE (M,E)@(E,E) output projection: the head
    # contraction runs on the MXU (contraction dim = E, not hd).
    ctx2d = jnp.concatenate(ctx_heads, axis=-1).reshape(m, e)
    attn_out = jnp.dot(ctx2d, wo_ref[...], preferred_element_type=f32) + bo_ref[...]

    # ---- MLP heads, flat over the batch block --------------------------------
    h1 = jnp.maximum(
        jnp.dot(attn_out.astype(mmdt), wk1_ref[...],
                preferred_element_type=f32) + bk1_ref[...], 0.0)
    kpred = jnp.dot(h1.astype(mmdt), wk2_ref[...],
                    preferred_element_type=f32) + bk2_ref[...]

    h2 = jnp.maximum(
        jnp.dot(node2d, wg1_ref[...],
                preferred_element_type=f32) + bg1_ref[...], 0.0)
    gpred = jnp.dot(h2.astype(mmdt), wg2_ref[...],
                    preferred_element_type=f32) + bg2_ref[...]

    # ---- lane-dense packed stores (single unmasked vst per output) -----------
    out_dt = pred_ref.dtype
    parts = [kpred.astype(out_dt), gpred.astype(out_dt)]
    pad = pred_ref.shape[-1] - 2 * e
    if pad:
        parts.append(jnp.zeros((m, pad), out_dt))
    pred_ref[...] = jnp.concatenate(parts, axis=-1)

    aw = (attnw_sum * (1.0 / H)).reshape(m, nk)              # head average, f32
    apad = attnw_ref.shape[-1] - nk
    if apad:
        aw = jnp.concatenate([aw, jnp.zeros((m, apad), f32)], axis=-1)
    attnw_ref[...] = aw.astype(attnw_ref.dtype)


def init_params(key, embed_dim):
    """Deterministic init; shapes mirror nn.MultiheadAttention / nn.Linear."""
    ks = jax.random.split(key, 12)
    e = embed_dim
    p = {}
    in_proj_w = jax.random.normal(ks[0], (3 * e, e), jnp.float32) * 0.05
    in_proj_b = jax.random.normal(ks[1], (3 * e,), jnp.float32) * 0.05
    p["wq"], p["wk"], p["wv"] = in_proj_w[:e], in_proj_w[e:2 * e], in_proj_w[2 * e:]
    p["bq"], p["bk"], p["bv"] = in_proj_b[:e], in_proj_b[e:2 * e], in_proj_b[2 * e:]
    p["wo"] = jax.random.normal(ks[2], (e, e), jnp.float32) * 0.05
    p["bo"] = jax.random.normal(ks[3], (e,), jnp.float32) * 0.05
    p["wk1"] = jax.random.normal(ks[4], (2 * e, e), jnp.float32) * 0.05
    p["bk1"] = jax.random.normal(ks[5], (2 * e,), jnp.float32) * 0.05
    p["wk2"] = jax.random.normal(ks[6], (e, 2 * e), jnp.float32) * 0.05
    p["bk2"] = jax.random.normal(ks[7], (e,), jnp.float32) * 0.05
    p["wg1"] = jax.random.normal(ks[8], (2 * e, e), jnp.float32) * 0.05
    p["bg1"] = jax.random.normal(ks[9], (2 * e,), jnp.float32) * 0.05
    p["wg2"] = jax.random.normal(ks[10], (e, 2 * e), jnp.float32) * 0.05
    p["bg2"] = jax.random.normal(ks[11], (e,), jnp.float32) * 0.05
    return p


def knode_transformer(node_features, k_node_embed, params, num_heads, alpha=1.0,
                      batch_block=None, compute_dtype=jnp.bfloat16,
                      vmem_limit_bytes=32 * 1024 * 1024):
    B, Nq, E = node_features.shape
    _, Nk, _ = k_node_embed.shape
    H = num_heads
    assert E % H == 0
    hd = E // H
    out_dt = node_features.dtype
    mmdt = jnp.dtype(compute_dtype) if compute_dtype is not None else out_dt

    # Batch blocking: >=2 blocks by default so both v7x TensorCores get work.
    if batch_block is None:
        batch_block = B // 2 if (B % 2 == 0 and B >= 2) else B
    bb = batch_block
    assert B % bb == 0, "batch_block must divide the batch"
    nblk = B // bb
    # Folded (bb*Nq, .) output blocks must satisfy the (8,128) sublane rule
    # unless a single block spans the whole batch.
    assert bb == B or (bb * Nq) % 8 == 0, \
        "bb*Nq must be a multiple of 8 when batch_block < batch"

    scale = 1.0 / math.sqrt(hd)

    # ---- wrapper-side weight prep (free; outside the kernel) -----------------
    def lin_w(w, pre=1.0):                      # torch (out,in) -> (in,out)
        return (jnp.asarray(w).T * pre).astype(mmdt)

    def lin_b(b, pre=1.0):
        return (jnp.asarray(b) * pre).reshape(1, -1).astype(jnp.float32)

    # K and V share the same LHS -> fuse into one (E, 2E) weight; fold alpha in.
    wkv = jnp.concatenate([jnp.asarray(params["wk"]).T,
                           jnp.asarray(params["wv"]).T], axis=1)
    bkv = jnp.concatenate([jnp.asarray(params["bk"]), jnp.asarray(params["bv"])])

    weight_args = [
        lin_w(params["wq"], scale), lin_b(params["bq"], scale),   # Q (pre-scaled)
        (alpha * wkv).astype(mmdt), bkv.reshape(1, -1).astype(jnp.float32),
        lin_w(params["wo"]), lin_b(params["bo"]),
        lin_w(params["wk1"]), lin_b(params["bk1"]),
        lin_w(params["wk2"]), lin_b(params["bk2"]),
        lin_w(params["wg1"]), lin_b(params["bg1"]),
        lin_w(params["wg2"]), lin_b(params["bg2"]),
    ]

    def full_spec(arr):
        # Whole weight resident for every grid step (grid-invariant block).
        # TODO(synk): at production E, add pipeline_mode=pl.Buffered(1) or stream
        # the MLP weights via pltpu.emit_pipeline to halve resident-weight VMEM.
        return pl.BlockSpec(arr.shape, lambda i: (0,) * arr.ndim)

    in_specs = [
        pl.BlockSpec((bb, Nq, E), lambda i: (i, 0, 0)),   # node_features block
        pl.BlockSpec((bb, Nk, E), lambda i: (i, 0, 0)),   # k_node_embed block
    ] + [full_spec(w) for w in weight_args]

    pred_w = _round_up(2 * E, 128)     # packed kpred|gpred slab width (lane-dense)
    attnw_w = _round_up(Nk, 128)       # padded attention-weight slab width

    out_specs = [
        pl.BlockSpec((bb * Nq, pred_w), lambda i: (i, 0)),
        pl.BlockSpec((bb * Nq, attnw_w), lambda i: (i, 0)),
    ]
    out_shapes = (
        jax.ShapeDtypeStruct((B * Nq, pred_w), out_dt),
        jax.ShapeDtypeStruct((B * Nq, attnw_w), jnp.float32),
    )

    kernel = functools.partial(_knode_kernel, num_heads=H, head_dim=hd)

    pred, attnw = pl.pallas_call(
        kernel,
        out_shape=out_shapes,
        grid=(nblk,),
        in_specs=in_specs,
        out_specs=out_specs,
        compiler_params=pltpu.CompilerParams(
            dimension_semantics=("parallel",),       # batch blocks split across TCs
            vmem_limit_bytes=vmem_limit_bytes),
    )(node_features.astype(mmdt), k_node_embed.astype(mmdt), *weight_args)

    k_node_pred = pred[:, :E].reshape(B, Nq, E)
    graph_node_pred = pred[:, E:2 * E].reshape(B, Nq, E)
    attn_weights = attnw[:, :Nk].reshape(B, Nq, Nk)
    return k_node_pred, graph_node_pred, attn_weights


def knode_transformer_ref(node, knode, params, num_heads, alpha=1.0):
    """Pure-JAX f32 reference of the PyTorch forward (correctness check)."""
    B, Nq, E = node.shape
    Nk = knode.shape[1]
    H = num_heads
    hd = E // H
    kin = alpha * knode

    def lin(x, w, b):
        return x @ jnp.asarray(w).T + jnp.asarray(b)

    q = lin(node, params["wq"], params["bq"])
    k = lin(kin, params["wk"], params["bk"])
    v = lin(kin, params["wv"], params["bv"])
    qh = q.reshape(B, Nq, H, hd).transpose(0, 2, 1, 3)
    kh = k.reshape(B, Nk, H, hd).transpose(0, 2, 1, 3)
    vh = v.reshape(B, Nk, H, hd).transpose(0, 2, 1, 3)
    s = jnp.einsum('bhqd,bhkd->bhqk', qh, kh) / math.sqrt(hd)
    p = jax.nn.softmax(s, axis=-1)
    ctx = jnp.einsum('bhqk,bhkd->bhqd', p, vh).transpose(0, 2, 1, 3).reshape(B, Nq, E)
    attn_out = lin(ctx, params["wo"], params["bo"])
    attnw = jnp.mean(p, axis=1)
    kpred = lin(jnp.maximum(lin(attn_out, params["wk1"], params["bk1"]), 0.0),
                params["wk2"], params["bk2"])
    gpred = lin(jnp.maximum(lin(node, params["wg1"], params["bg1"]), 0.0),
                params["wg2"], params["bg2"])
    return kpred, gpred, attnw


if __name__ == "__main__":
    key = jax.random.PRNGKey(0)
    B, Nq, Nk, E, H = 2, 8, 8, 32, 4

    k0, k1, k2 = jax.random.split(key, 3)
    node_features = jax.random.normal(k0, (B, Nq, E), jnp.float32)
    k_node_embed = jax.random.normal(k1, (B, Nk, E), jnp.float32)
    params = init_params(k2, E)

    outs = knode_transformer(node_features, k_node_embed, params,
                             num_heads=H, alpha=1.0)
    jax.block_until_ready(outs)
    k_node_pred, graph_node_pred, attn_weights = outs

    assert k_node_pred.shape == (B, Nq, E)
    assert graph_node_pred.shape == (B, Nq, E)
    assert attn_weights.shape == (B, Nq, Nk)
    assert attn_weights.dtype == jnp.float32

    # bf16 matmul operands with f32 accumulation -> small deviations vs f32 ref.
    refs = knode_transformer_ref(node_features, k_node_embed, params, H)
    for got, want in zip(outs, refs):
        err = float(jnp.max(jnp.abs(got.astype(jnp.float32) - want)))
        assert err < 2e-2, f"max abs err {err}"

    print("KERNEL_OK")
</pallas_src>

<mosaic_0001>
module attributes {stable_mosaic.version = 11 : i64} {
  func.func @_knode_kernel(%arg0: i32, %arg1: memref<1x8x32xbf16, #tpu.memory_space<vmem>>, %arg2: memref<1x8x32xbf16, #tpu.memory_space<vmem>>, %arg3: memref<32x32xbf16, #tpu.memory_space<vmem>>, %arg4: memref<1x32xf32, #tpu.memory_space<vmem>>, %arg5: memref<32x64xbf16, #tpu.memory_space<vmem>>, %arg6: memref<1x64xf32, #tpu.memory_space<vmem>>, %arg7: memref<32x32xbf16, #tpu.memory_space<vmem>>, %arg8: memref<1x32xf32, #tpu.memory_space<vmem>>, %arg9: memref<32x64xbf16, #tpu.memory_space<vmem>>, %arg10: memref<1x64xf32, #tpu.memory_space<vmem>>, %arg11: memref<64x32xbf16, #tpu.memory_space<vmem>>, %arg12: memref<1x32xf32, #tpu.memory_space<vmem>>, %arg13: memref<32x64xbf16, #tpu.memory_space<vmem>>, %arg14: memref<1x64xf32, #tpu.memory_space<vmem>>, %arg15: memref<64x32xbf16, #tpu.memory_space<vmem>>, %arg16: memref<1x32xf32, #tpu.memory_space<vmem>>, %arg17: memref<8x128xf32, #tpu.memory_space<vmem>>, %arg18: memref<8x128xf32, #tpu.memory_space<vmem>>) attributes {dimension_semantics = [#tpu.dimension_semantics<parallel>], iteration_bounds = array<i64: 2>, scalar_prefetch = 0 : i64, scratch_operands = 0 : i64, tpu.core_type = #tpu.core_type<tc>, window_params = [{transform_indices = @transform_0, window_bounds = array<i64: 1, 8, 32>}, {transform_indices = @transform_1, window_bounds = array<i64: 1, 8, 32>}, {pipeline_mode = #tpu.pipeline_mode<synchronous>, transform_indices = @transform_2, window_bounds = array<i64: 32, 32>}, {pipeline_mode = #tpu.pipeline_mode<synchronous>, transform_indices = @transform_3, window_bounds = array<i64: 1, 32>}, {pipeline_mode = #tpu.pipeline_mode<synchronous>, transform_indices = @transform_4, window_bounds = array<i64: 32, 64>}, {pipeline_mode = #tpu.pipeline_mode<synchronous>, transform_indices = @transform_5, window_bounds = array<i64: 1, 64>}, {pipeline_mode = #tpu.pipeline_mode<synchronous>, transform_indices = @transform_6, window_bounds = array<i64: 32, 32>}, {pipeline_mode = #tpu.pipeline_mode<synchronous>, transform_indices = @transform_7, window_bounds = array<i64: 1, 32>}, {pipeline_mode = #tpu.pipeline_mode<synchronous>, transform_indices = @transform_8, window_bounds = array<i64: 32, 64>}, {pipeline_mode = #tpu.pipeline_mode<synchronous>, transform_indices = @transform_9, window_bounds = array<i64: 1, 64>}, {pipeline_mode = #tpu.pipeline_mode<synchronous>, transform_indices = @transform_10, window_bounds = array<i64: 64, 32>}, {pipeline_mode = #tpu.pipeline_mode<synchronous>, transform_indices = @transform_11, window_bounds = array<i64: 1, 32>}, {pipeline_mode = #tpu.pipeline_mode<synchronous>, transform_indices = @transform_12, window_bounds = array<i64: 32, 64>}, {pipeline_mode = #tpu.pipeline_mode<synchronous>, transform_indices = @transform_13, window_bounds = array<i64: 1, 64>}, {pipeline_mode = #tpu.pipeline_mode<synchronous>, transform_indices = @transform_14, window_bounds = array<i64: 64, 32>}, {pipeline_mode = #tpu.pipeline_mode<synchronous>, transform_indices = @transform_15, window_bounds = array<i64: 1, 32>}, {transform_indices = @transform_16, window_bounds = array<i64: 8, 128>}, {transform_indices = @transform_17, window_bounds = array<i64: 8, 128>}]} {
    %c0 = arith.constant 0 : index
    %c0_0 = arith.constant 0 : index
    %c0_1 = arith.constant 0 : index
    %0 = vector.load %arg1[%c0, %c0_0, %c0_1] : memref<1x8x32xbf16, #tpu.memory_space<vmem>>, vector<1x8x32xbf16>
    %c0_2 = arith.constant 0 : index
    %c0_3 = arith.constant 0 : index
    %c0_4 = arith.constant 0 : index
    %1 = vector.load %arg2[%c0_2, %c0_3, %c0_4] : memref<1x8x32xbf16, #tpu.memory_space<vmem>>, vector<1x8x32xbf16>
    %2 = vector.shape_cast %0 : vector<1x8x32xbf16> to vector<8x32xbf16>
    %3 = vector.shape_cast %1 : vector<1x8x32xbf16> to vector<8x32xbf16>
    %c0_5 = arith.constant 0 : index
    %c0_6 = arith.constant 0 : index
    %4 = vector.load %arg3[%c0_5, %c0_6] : memref<32x32xbf16, #tpu.memory_space<vmem>>, vector<32x32xbf16>
    %cst = arith.constant dense<0.000000e+00> : vector<8x32xf32>
    %5 = tpu.matmul %2, %4, %cst {dimension_numbers = #tpu.dot_dimension_numbers<[1], [0], [0], [1], [0, 0, 1, 1], [], []>} : vector<8x32xbf16>, vector<32x32xbf16>, vector<8x32xf32> -> vector<8x32xf32>
    %c0_7 = arith.constant 0 : index
    %c0_8 = arith.constant 0 : index
    %6 = vector.load %arg4[%c0_7, %c0_8] : memref<1x32xf32, #tpu.memory_space<vmem>>, vector<1x32xf32>
    %7 = vector.broadcast %6 : vector<1x32xf32> to vector<8x32xf32>
    %8 = arith.addf %5, %7 : vector<8x32xf32>
    %c0_9 = arith.constant 0 : index
    %c0_10 = arith.constant 0 : index
    %9 = vector.load %arg5[%c0_9, %c0_10] : memref<32x64xbf16, #tpu.memory_space<vmem>>, vector<32x64xbf16>
    %cst_11 = arith.constant dense<0.000000e+00> : vector<8x64xf32>
    %10 = tpu.matmul %3, %9, %cst_11 {dimension_numbers = #tpu.dot_dimension_numbers<[1], [0], [0], [1], [0, 0, 1, 1], [], []>} : vector<8x32xbf16>, vector<32x64xbf16>, vector<8x64xf32> -> vector<8x64xf32>
    %c0_12 = arith.constant 0 : index
    %c0_13 = arith.constant 0 : index
    %11 = vector.load %arg6[%c0_12, %c0_13] : memref<1x64xf32, #tpu.memory_space<vmem>>, vector<1x64xf32>
    %12 = vector.broadcast %11 : vector<1x64xf32> to vector<8x64xf32>
    %13 = arith.addf %10, %12 : vector<8x64xf32>
    %14 = arith.truncf %8 : vector<8x32xf32> to vector<8x32xbf16>
    %15 = vector.shape_cast %14 : vector<8x32xbf16> to vector<1x8x32xbf16>
    %16 = vector.extract_strided_slice %13 {offsets = [0, 0], sizes = [8, 32], strides = [1, 1]} : vector<8x64xf32> to vector<8x32xf32>
    %17 = arith.truncf %16 : vector<8x32xf32> to vector<8x32xbf16>
    %18 = vector.shape_cast %17 : vector<8x32xbf16> to vector<1x8x32xbf16>
    %19 = vector.extract_strided_slice %13 {offsets = [0, 32], sizes = [8, 32], strides = [1, 1]} : vector<8x64xf32> to vector<8x32xf32>
    %20 = arith.truncf %19 : vector<8x32xf32> to vector<8x32xbf16>
    %21 = vector.shape_cast %20 : vector<8x32xbf16> to vector<1x8x32xbf16>
    %cst_14 = arith.constant 0.000000e+00 : f32
    %22 = vector.broadcast %cst_14 : f32 to vector<1x8x8xf32>
    %23 = vector.extract_strided_slice %15 {offsets = [0, 0, 0], sizes = [1, 8, 8], strides = [1, 1, 1]} : vector<1x8x32xbf16> to vector<1x8x8xbf16>
    %24 = vector.extract_strided_slice %18 {offsets = [0, 0, 0], sizes = [1, 8, 8], strides = [1, 1, 1]} : vector<1x8x32xbf16> to vector<1x8x8xbf16>
    "tpu.trace_start"() <{level = 10 : i32, message = "bqd,bkd->bqk"}> : () -> ()
    %cst_15 = arith.constant dense<0.000000e+00> : vector<1x8x8xf32>
    %25 = tpu.matmul %23, %24, %cst_15 {dimension_numbers = #tpu.dot_dimension_numbers<[2], [2], [1], [1], [0, 0, 0, 1, 1, 1], [0], [0]>} : vector<1x8x8xbf16>, vector<1x8x8xbf16>, vector<1x8x8xf32> -> vector<1x8x8xf32>
    "tpu.trace_stop"() : () -> ()
    %cst_16 = arith.constant dense<0xFF800000> : vector<1x8xf32>
    %26 = vector.multi_reduction <maximumf>, %25, %cst_16 [2] : vector<1x8x8xf32> to vector<1x8xf32>
    %27 = vector.shape_cast %26 : vector<1x8xf32> to vector<1x8x1xf32>
    %28 = vector.broadcast %27 : vector<1x8x1xf32> to vector<1x8x8xf32>
    %29 = arith.subf %25, %28 : vector<1x8x8xf32>
    %30 = math.exp %29 : vector<1x8x8xf32>
    %cst_17 = arith.constant dense<0.000000e+00> : vector<1x8xf32>
    %31 = vector.multi_reduction <add>, %30, %cst_17 [2] : vector<1x8x8xf32> to vector<1x8xf32>
    %32 = vector.shape_cast %31 : vector<1x8xf32> to vector<1x8x1xf32>
    %33 = vector.broadcast %32 : vector<1x8x1xf32> to vector<1x8x8xf32>
    %34 = arith.divf %30, %33 : vector<1x8x8xf32>
    %35 = arith.addf %22, %34 : vector<1x8x8xf32>
    %36 = arith.truncf %34 : vector<1x8x8xf32> to vector<1x8x8xbf16>
    %37 = vector.extract_strided_slice %21 {offsets = [0, 0, 0], sizes = [1, 8, 8], strides = [1, 1, 1]} : vector<1x8x32xbf16> to vector<1x8x8xbf16>
    "tpu.trace_start"() <{level = 10 : i32, message = "bqk,bkd->bqd"}> : () -> ()
    %cst_18 = arith.constant dense<0.000000e+00> : vector<1x8x8xf32>
    %38 = tpu.matmul %36, %37, %cst_18 {dimension_numbers = #tpu.dot_dimension_numbers<[2], [1], [1], [2], [0, 0, 0, 1, 1, 2], [0], [0]>} : vector<1x8x8xbf16>, vector<1x8x8xbf16>, vector<1x8x8xf32> -> vector<1x8x8xf32>
    "tpu.trace_stop"() : () -> ()
    %39 = arith.truncf %38 : vector<1x8x8xf32> to vector<1x8x8xbf16>
    %40 = vector.extract_strided_slice %15 {offsets = [0, 0, 8], sizes = [1, 8, 8], strides = [1, 1, 1]} : vector<1x8x32xbf16> to vector<1x8x8xbf16>
    %41 = vector.extract_strided_slice %18 {offsets = [0, 0, 8], sizes = [1, 8, 8], strides = [1, 1, 1]} : vector<1x8x32xbf16> to vector<1x8x8xbf16>
    "tpu.trace_start"() <{level = 10 : i32, message = "bqd,bkd->bqk"}> : () -> ()
    %cst_19 = arith.constant dense<0.000000e+00> : vector<1x8x8xf32>
    %42 = tpu.matmul %40, %41, %cst_19 {dimension_numbers = #tpu.dot_dimension_numbers<[2], [2], [1], [1], [0, 0, 0, 1, 1, 1], [0], [0]>} : vector<1x8x8xbf16>, vector<1x8x8xbf16>, vector<1x8x8xf32> -> vector<1x8x8xf32>
    "tpu.trace_stop"() : () -> ()
    %cst_20 = arith.constant dense<0xFF800000> : vector<1x8xf32>
    %43 = vector.multi_reduction <maximumf>, %42, %cst_20 [2] : vector<1x8x8xf32> to vector<1x8xf32>
    %44 = vector.shape_cast %43 : vector<1x8xf32> to vector<1x8x1xf32>
    %45 = vector.broadcast %44 : vector<1x8x1xf32> to vector<1x8x8xf32>
    %46 = arith.subf %42, %45 : vector<1x8x8xf32>
    %47 = math.exp %46 : vector<1x8x8xf32>
    %cst_21 = arith.constant dense<0.000000e+00> : vector<1x8xf32>
    %48 = vector.multi_reduction <add>, %47, %cst_21 [2] : vector<1x8x8xf32> to vector<1x8xf32>
    %49 = vector.shape_cast %48 : vector<1x8xf32> to vector<1x8x1xf32>
    %50 = vector.broadcast %49 : vector<1x8x1xf32> to vector<1x8x8xf32>
    %51 = arith.divf %47, %50 : vector<1x8x8xf32>
    %52 = arith.addf %35, %51 : vector<1x8x8xf32>
    %53 = arith.truncf %51 : vector<1x8x8xf32> to vector<1x8x8xbf16>
    %54 = vector.extract_strided_slice %21 {offsets = [0, 0, 8], sizes = [1, 8, 8], strides = [1, 1, 1]} : vector<1x8x32xbf16> to vector<1x8x8xbf16>
    "tpu.trace_start"() <{level = 10 : i32, message = "bqk,bkd->bqd"}> : () -> ()
    %cst_22 = arith.constant dense<0.000000e+00> : vector<1x8x8xf32>
    %55 = tpu.matmul %53, %54, %cst_22 {dimension_numbers = #tpu.dot_dimension_numbers<[2], [1], [1], [2], [0, 0, 0, 1, 1, 2], [0], [0]>} : vector<1x8x8xbf16>, vector<1x8x8xbf16>, vector<1x8x8xf32> -> vector<1x8x8xf32>
    "tpu.trace_stop"() : () -> ()
    %56 = arith.truncf %55 : vector<1x8x8xf32> to vector<1x8x8xbf16>
    %57 = vector.extract_strided_slice %15 {offsets = [0, 0, 16], sizes = [1, 8, 8], strides = [1, 1, 1]} : vector<1x8x32xbf16> to vector<1x8x8xbf16>
    %58 = vector.extract_strided_slice %18 {offsets = [0, 0, 16], sizes = [1, 8, 8], strides = [1, 1, 1]} : vector<1x8x32xbf16> to vector<1x8x8xbf16>
    "tpu.trace_start"() <{level = 10 : i32, message = "bqd,bkd->bqk"}> : () -> ()
    %cst_23 = arith.constant dense<0.000000e+00> : vector<1x8x8xf32>
    %59 = tpu.matmul %57, %58, %cst_23 {dimension_numbers = #tpu.dot_dimension_numbers<[2], [2], [1], [1], [0, 0, 0, 1, 1, 1], [0], [0]>} : vector<1x8x8xbf16>, vector<1x8x8xbf16>, vector<1x8x8xf32> -> vector<1x8x8xf32>
    "tpu.trace_stop"() : () -> ()
    %cst_24 = arith.constant dense<0xFF800000> : vector<1x8xf32>
    %60 = vector.multi_reduction <maximumf>, %59, %cst_24 [2] : vector<1x8x8xf32> to vector<1x8xf32>
    %61 = vector.shape_cast %60 : vector<1x8xf32> to vector<1x8x1xf32>
    %62 = vector.broadcast %61 : vector<1x8x1xf32> to vector<1x8x8xf32>
    %63 = arith.subf %59, %62 : vector<1x8x8xf32>
    %64 = math.exp %63 : vector<1x8x8xf32>
    %cst_25 = arith.constant dense<0.000000e+00> : vector<1x8xf32>
    %65 = vector.multi_reduction <add>, %64, %cst_25 [2] : vector<1x8x8xf32> to vector<1x8xf32>
    %66 = vector.shape_cast %65 : vector<1x8xf32> to vector<1x8x1xf32>
    %67 = vector.broadcast %66 : vector<1x8x1xf32> to vector<1x8x8xf32>
    %68 = arith.divf %64, %67 : vector<1x8x8xf32>
    %69 = arith.addf %52, %68 : vector<1x8x8xf32>
    %70 = arith.truncf %68 : vector<1x8x8xf32> to vector<1x8x8xbf16>
    %71 = vector.extract_strided_slice %21 {offsets = [0, 0, 16], sizes = [1, 8, 8], strides = [1, 1, 1]} : vector<1x8x32xbf16> to vector<1x8x8xbf16>
    "tpu.trace_start"() <{level = 10 : i32, message = "bqk,bkd->bqd"}> : () -> ()
    %cst_26 = arith.constant dense<0.000000e+00> : vector<1x8x8xf32>
    %72 = tpu.matmul %70, %71, %cst_26 {dimension_numbers = #tpu.dot_dimension_numbers<[2], [1], [1], [2], [0, 0, 0, 1, 1, 2], [0], [0]>} : vector<1x8x8xbf16>, vector<1x8x8xbf16>, vector<1x8x8xf32> -> vector<1x8x8xf32>
    "tpu.trace_stop"() : () -> ()
    %73 = arith.truncf %72 : vector<1x8x8xf32> to vector<1x8x8xbf16>
    %74 = vector.extract_strided_slice %15 {offsets = [0, 0, 24], sizes = [1, 8, 8], strides = [1, 1, 1]} : vector<1x8x32xbf16> to vector<1x8x8xbf16>
    %75 = vector.extract_strided_slice %18 {offsets = [0, 0, 24], sizes = [1, 8, 8], strides = [1, 1, 1]} : vector<1x8x32xbf16> to vector<1x8x8xbf16>
    "tpu.trace_start"() <{level = 10 : i32, message = "bqd,bkd->bqk"}> : () -> ()
    %cst_27 = arith.constant dense<0.000000e+00> : vector<1x8x8xf32>
    %76 = tpu.matmul %74, %75, %cst_27 {dimension_numbers = #tpu.dot_dimension_numbers<[2], [2], [1], [1], [0, 0, 0, 1, 1, 1], [0], [0]>} : vector<1x8x8xbf16>, vector<1x8x8xbf16>, vector<1x8x8xf32> -> vector<1x8x8xf32>
    "tpu.trace_stop"() : () -> ()
    %cst_28 = arith.constant dense<0xFF800000> : vector<1x8xf32>
    %77 = vector.multi_reduction <maximumf>, %76, %cst_28 [2] : vector<1x8x8xf32> to vector<1x8xf32>
    %78 = vector.shape_cast %77 : vector<1x8xf32> to vector<1x8x1xf32>
    %79 = vector.broadcast %78 : vector<1x8x1xf32> to vector<1x8x8xf32>
    %80 = arith.subf %76, %79 : vector<1x8x8xf32>
    %81 = math.exp %80 : vector<1x8x8xf32>
    %cst_29 = arith.constant dense<0.000000e+00> : vector<1x8xf32>
    %82 = vector.multi_reduction <add>, %81, %cst_29 [2] : vector<1x8x8xf32> to vector<1x8xf32>
    %83 = vector.shape_cast %82 : vector<1x8xf32> to vector<1x8x1xf32>
    %84 = vector.broadcast %83 : vector<1x8x1xf32> to vector<1x8x8xf32>
    %85 = arith.divf %81, %84 : vector<1x8x8xf32>
    %86 = arith.addf %69, %85 : vector<1x8x8xf32>
    %87 = arith.truncf %85 : vector<1x8x8xf32> to vector<1x8x8xbf16>
    %88 = vector.extract_strided_slice %21 {offsets = [0, 0, 24], sizes = [1, 8, 8], strides = [1, 1, 1]} : vector<1x8x32xbf16> to vector<1x8x8xbf16>
    "tpu.trace_start"() <{level = 10 : i32, message = "bqk,bkd->bqd"}> : () -> ()
    %cst_30 = arith.constant dense<0.000000e+00> : vector<1x8x8xf32>
    %89 = tpu.matmul %87, %88, %cst_30 {dimension_numbers = #tpu.dot_dimension_numbers<[2], [1], [1], [2], [0, 0, 0, 1, 1, 2], [0], [0]>} : vector<1x8x8xbf16>, vector<1x8x8xbf16>, vector<1x8x8xf32> -> vector<1x8x8xf32>
    "tpu.trace_stop"() : () -> ()
    %90 = arith.truncf %89 : vector<1x8x8xf32> to vector<1x8x8xbf16>
    %91 = tpu.concatenate %39, %56, %73, %90 in 2 : vector<1x8x8xbf16>, vector<1x8x8xbf16>, vector<1x8x8xbf16>, vector<1x8x8xbf16> -> vector<1x8x32xbf16>
    %92 = vector.shape_cast %91 : vector<1x8x32xbf16> to vector<8x32xbf16>
    %c0_31 = arith.constant 0 : index
    %c0_32 = arith.constant 0 : index
    %93 = vector.load %arg7[%c0_31, %c0_32] : memref<32x32xbf16, #tpu.memory_space<vmem>>, vector<32x32xbf16>
    %cst_33 = arith.constant dense<0.000000e+00> : vector<8x32xf32>
    %94 = tpu.matmul %92, %93, %cst_33 {dimension_numbers = #tpu.dot_dimension_numbers<[1], [0], [0], [1], [0, 0, 1, 1], [], []>} : vector<8x32xbf16>, vector<32x32xbf16>, vector<8x32xf32> -> vector<8x32xf32>
    %c0_34 = arith.constant 0 : index
    %c0_35 = arith.constant 0 : index
    %95 = vector.load %arg8[%c0_34, %c0_35] : memref<1x32xf32, #tpu.memory_space<vmem>>, vector<1x32xf32>
    %96 = vector.broadcast %95 : vector<1x32xf32> to vector<8x32xf32>
    %97 = arith.addf %94, %96 : vector<8x32xf32>
    %98 = arith.truncf %97 : vector<8x32xf32> to vector<8x32xbf16>
    %c0_36 = arith.constant 0 : index
    %c0_37 = arith.constant 0 : index
    %99 = vector.load %arg9[%c0_36, %c0_37] : memref<32x64xbf16, #tpu.memory_space<vmem>>, vector<32x64xbf16>
    %cst_38 = arith.constant dense<0.000000e+00> : vector<8x64xf32>
    %100 = tpu.matmul %98, %99, %cst_38 {dimension_numbers = #tpu.dot_dimension_numbers<[1], [0], [0], [1], [0, 0, 1, 1], [], []>} : vector<8x32xbf16>, vector<32x64xbf16>, vector<8x64xf32> -> vector<8x64xf32>
    %c0_39 = arith.constant 0 : index
    %c0_40 = arith.constant 0 : index
    %101 = vector.load %arg10[%c0_39, %c0_40] : memref<1x64xf32, #tpu.memory_space<vmem>>, vector<1x64xf32>
    %102 = vector.broadcast %101 : vector<1x64xf32> to vector<8x64xf32>
    %103 = arith.addf %100, %102 : vector<8x64xf32>
    %cst_41 = arith.constant 0.000000e+00 : f32
    %104 = vector.broadcast %cst_41 : f32 to vector<8x64xf32>
    %105 = arith.maximumf %103, %104 : vector<8x64xf32>
    %106 = arith.truncf %105 : vector<8x64xf32> to vector<8x64xbf16>
    %c0_42 = arith.constant 0 : index
    %c0_43 = arith.constant 0 : index
    %107 = vector.load %arg11[%c0_42, %c0_43] : memref<64x32xbf16, #tpu.memory_space<vmem>>, vector<64x32xbf16>
    %cst_44 = arith.constant dense<0.000000e+00> : vector<8x32xf32>
    %108 = tpu.matmul %106, %107, %cst_44 {dimension_numbers = #tpu.dot_dimension_numbers<[1], [0], [0], [1], [0, 0, 1, 1], [], []>} : vector<8x64xbf16>, vector<64x32xbf16>, vector<8x32xf32> -> vector<8x32xf32>
    %c0_45 = arith.constant 0 : index
    %c0_46 = arith.constant 0 : index
    %109 = vector.load %arg12[%c0_45, %c0_46] : memref<1x32xf32, #tpu.memory_space<vmem>>, vector<1x32xf32>
    %110 = vector.broadcast %109 : vector<1x32xf32> to vector<8x32xf32>
    %111 = arith.addf %108, %110 : vector<8x32xf32>
    %c0_47 = arith.constant 0 : index
    %c0_48 = arith.constant 0 : index
    %112 = vector.load %arg13[%c0_47, %c0_48] : memref<32x64xbf16, #tpu.memory_space<vmem>>, vector<32x64xbf16>
    %cst_49 = arith.constant dense<0.000000e+00> : vector<8x64xf32>
    %113 = tpu.matmul %2, %112, %cst_49 {dimension_numbers = #tpu.dot_dimension_numbers<[1], [0], [0], [1], [0, 0, 1, 1], [], []>} : vector<8x32xbf16>, vector<32x64xbf16>, vector<8x64xf32> -> vector<8x64xf32>
    %c0_50 = arith.constant 0 : index
    %c0_51 = arith.constant 0 : index
    %114 = vector.load %arg14[%c0_50, %c0_51] : memref<1x64xf32, #tpu.memory_space<vmem>>, vector<1x64xf32>
    %115 = vector.broadcast %114 : vector<1x64xf32> to vector<8x64xf32>
    %116 = arith.addf %113, %115 : vector<8x64xf32>
    %cst_52 = arith.constant 0.000000e+00 : f32
    %117 = vector.broadcast %cst_52 : f32 to vector<8x64xf32>
    %118 = arith.maximumf %116, %117 : vector<8x64xf32>
    %119 = arith.truncf %118 : vector<8x64xf32> to vector<8x64xbf16>
    %c0_53 = arith.constant 0 : index
    %c0_54 = arith.constant 0 : index
    %120 = vector.load %arg15[%c0_53, %c0_54] : memref<64x32xbf16, #tpu.memory_space<vmem>>, vector<64x32xbf16>
    %cst_55 = arith.constant dense<0.000000e+00> : vector<8x32xf32>
    %121 = tpu.matmul %119, %120, %cst_55 {dimension_numbers = #tpu.dot_dimension_numbers<[1], [0], [0], [1], [0, 0, 1, 1], [], []>} : vector<8x64xbf16>, vector<64x32xbf16>, vector<8x32xf32> -> vector<8x32xf32>
    %c0_56 = arith.constant 0 : index
    %c0_57 = arith.constant 0 : index
    %122 = vector.load %arg16[%c0_56, %c0_57] : memref<1x32xf32, #tpu.memory_space<vmem>>, vector<1x32xf32>
    %123 = vector.broadcast %122 : vector<1x32xf32> to vector<8x32xf32>
    %124 = arith.addf %121, %123 : vector<8x32xf32>
    %cst_58 = arith.constant 0.000000e+00 : f32
    %125 = vector.broadcast %cst_58 : f32 to vector<8x64xf32>
    %126 = tpu.concatenate %111, %124, %125 in 1 : vector<8x32xf32>, vector<8x32xf32>, vector<8x64xf32> -> vector<8x128xf32>
    %c0_59 = arith.constant 0 : index
    %c0_60 = arith.constant 0 : index
    %127 = vector.load %arg17[%c0_59, %c0_60] : memref<8x128xf32, #tpu.memory_space<vmem>>, vector<8x128xf32>
    tpu.vector_store %arg17[%c0_59, %c0_60], %126 {strides = array<i32>} : memref<8x128xf32, #tpu.memory_space<vmem>>, vector<8x128xf32>,
    %cst_61 = arith.constant 2.500000e-01 : f32
    %128 = vector.broadcast %cst_61 : f32 to vector<1x8x8xf32>
    %129 = arith.mulf %86, %128 : vector<1x8x8xf32>
    %130 = vector.shape_cast %129 : vector<1x8x8xf32> to vector<8x8xf32>
    %cst_62 = arith.constant 0.000000e+00 : f32
    %131 = vector.broadcast %cst_62 : f32 to vector<8x120xf32>
    %132 = tpu.concatenate %130, %131 in 1 : vector<8x8xf32>, vector<8x120xf32> -> vector<8x128xf32>
    %c0_63 = arith.constant 0 : index
    %c0_64 = arith.constant 0 : index
    %133 = vector.load %arg18[%c0_63, %c0_64] : memref<8x128xf32, #tpu.memory_space<vmem>>, vector<8x128xf32>
    tpu.vector_store %arg18[%c0_63, %c0_64], %132 {strides = array<i32>} : memref<8x128xf32, #tpu.memory_space<vmem>>, vector<8x128xf32>,
    return
  }
  func.func @transform_0(%arg0: i32) -> (i32, i32, i32) {
    %c0_i32 = arith.constant 0 : i32
    %c0_i32_0 = arith.constant 0 : i32
    %c0_i32_1 = arith.constant 0 : i32
    return %arg0, %c0_i32, %c0_i32_0 : i32, i32, i32
  }
  func.func @transform_1(%arg0: i32) -> (i32, i32, i32) {
    %c0_i32 = arith.constant 0 : i32
    %c0_i32_0 = arith.constant 0 : i32
    %c0_i32_1 = arith.constant 0 : i32
    return %arg0, %c0_i32, %c0_i32_0 : i32, i32, i32
  }
  func.func @transform_2(%arg0: i32) -> (i32, i32) {
    %c0_i32 = arith.constant 0 : i32
    %c0_i32_0 = arith.constant 0 : i32
    %c0_i32_1 = arith.constant 0 : i32
    return %c0_i32, %c0_i32_0 : i32, i32
  }
  func.func @transform_3(%arg0: i32) -> (i32, i32) {
    %c0_i32 = arith.constant 0 : i32
    %c0_i32_0 = arith.constant 0 : i32
    %c0_i32_1 = arith.constant 0 : i32
    return %c0_i32, %c0_i32_0 : i32, i32
  }
  func.func @transform_4(%arg0: i32) -> (i32, i32) {
    %c0_i32 = arith.constant 0 : i32
    %c0_i32_0 = arith.constant 0 : i32
    %c0_i32_1 = arith.constant 0 : i32
    return %c0_i32, %c0_i32_0 : i32, i32
  }
  func.func @transform_5(%arg0: i32) -> (i32, i32) {
    %c0_i32 = arith.constant 0 : i32
    %c0_i32_0 = arith.constant 0 : i32
    %c0_i32_1 = arith.constant 0 : i32
    return %c0_i32, %c0_i32_0 : i32, i32
  }
  func.func @transform_6(%arg0: i32) -> (i32, i32) {
    %c0_i32 = arith.constant 0 : i32
    %c0_i32_0 = arith.constant 0 : i32
    %c0_i32_1 = arith.constant 0 : i32
    return %c0_i32, %c0_i32_0 : i32, i32
  }
  func.func @transform_7(%arg0: i32) -> (i32, i32) {
    %c0_i32 = arith.constant 0 : i32
    %c0_i32_0 = arith.constant 0 : i32
    %c0_i32_1 = arith.constant 0 : i32
    return %c0_i32, %c0_i32_0 : i32, i32
  }
  func.func @transform_8(%arg0: i32) -> (i32, i32) {
    %c0_i32 = arith.constant 0 : i32
    %c0_i32_0 = arith.constant 0 : i32
    %c0_i32_1 = arith.constant 0 : i32
    return %c0_i32, %c0_i32_0 : i32, i32
  }
  func.func @transform_9(%arg0: i32) -> (i32, i32) {
    %c0_i32 = arith.constant 0 : i32
    %c0_i32_0 = arith.constant 0 : i32
    %c0_i32_1 = arith.constant 0 : i32
    return %c0_i32, %c0_i32_0 : i32, i32
  }
  func.func @transform_10(%arg0: i32) -> (i32, i32) {
    %c0_i32 = arith.constant 0 : i32
    %c0_i32_0 = arith.constant 0 : i32
    %c0_i32_1 = arith.constant 0 : i32
    return %c0_i32, %c0_i32_0 : i32, i32
  }
  func.func @transform_11(%arg0: i32) -> (i32, i32) {
    %c0_i32 = arith.constant 0 : i32
    %c0_i32_0 = arith.constant 0 : i32
    %c0_i32_1 = arith.constant 0 : i32
    return %c0_i32, %c0_i32_0 : i32, i32
  }
  func.func @transform_12(%arg0: i32) -> (i32, i32) {
    %c0_i32 = arith.constant 0 : i32
    %c0_i32_0 = arith.constant 0 : i32
    %c0_i32_1 = arith.constant 0 : i32
    return %c0_i32, %c0_i32_0 : i32, i32
  }
  func.func @transform_13(%arg0: i32) -> (i32, i32) {
    %c0_i32 = arith.constant 0 : i32
    %c0_i32_0 = arith.constant 0 : i32
    %c0_i32_1 = arith.constant 0 : i32
    return %c0_i32, %c0_i32_0 : i32, i32
  }
  func.func @transform_14(%arg0: i32) -> (i32, i32) {
    %c0_i32 = arith.constant 0 : i32
    %c0_i32_0 = arith.constant 0 : i32
    %c0_i32_1 = arith.constant 0 : i32
    return %c0_i32, %c0_i32_0 : i32, i32
  }
  func.func @transform_15(%arg0: i32) -> (i32, i32) {
    %c0_i32 = arith.constant 0 : i32
    %c0_i32_0 = arith.constant 0 : i32
    %c0_i32_1 = arith.constant 0 : i32
    return %c0_i32, %c0_i32_0 : i32, i32
  }
  func.func @transform_16(%arg0: i32) -> (i32, i32) {
    %c0_i32 = arith.constant 0 : i32
    %c0_i32_0 = arith.constant 0 : i32
    return %arg0, %c0_i32 : i32, i32
  }
  func.func @transform_17(%arg0: i32) -> (i32, i32) {
    %c0_i32 = arith.constant 0 : i32
    %c0_i32_0 = arith.constant 0 : i32
    return %arg0, %c0_i32 : i32, i32
  }
}

</mosaic_0001>

<llo_original>
// kernel: tpu_custom_call.1
$region0: #{tpu_custom_call.1}
  #allocation0 [shape = 'u32[]', space=smem, size = 0x4, offset = 0x4, fixed_abs, tag = 'smem constant byte address 0x4 - core index']
  #allocation1 [shape = 'u32[144,128]{1,0:T(1,128)}', space=vmem, size = 0x12000, scoped, tag = 'internal scratch']
  %s0 = inlined_call_operand.hbm [shape: bf16[2,8,32], index: 0, kind: input, shape index: {}]
  %s1 = inlined_call_operand.hbm [shape: bf16[2,8,32], index: 1, kind: input, shape index: {}]
  %s2 = inlined_call_operand.vmem [shape: bf16[32,32], index: 2, kind: input, shape index: {}]
  %s3 = inlined_call_operand.vmem [shape: f32[1,32], index: 3, kind: input, shape index: {}]
  %s4 = inlined_call_operand.vmem [shape: bf16[32,64], index: 4, kind: input, shape index: {}]
  %s5 = inlined_call_operand.vmem [shape: f32[1,64], index: 5, kind: input, shape index: {}]
  %s6 = inlined_call_operand.vmem [shape: bf16[32,32], index: 6, kind: input, shape index: {}]
  %s7 = inlined_call_operand.vmem [shape: f32[1,32], index: 7, kind: input, shape index: {}]
  %s8 = inlined_call_operand.vmem [shape: bf16[32,64], index: 8, kind: input, shape index: {}]
  %s9 = inlined_call_operand.vmem [shape: f32[1,64], index: 9, kind: input, shape index: {}]
  %s10 = inlined_call_operand.vmem [shape: bf16[64,32], index: 10, kind: input, shape index: {}]
  %s11 = inlined_call_operand.vmem [shape: f32[1,32], index: 11, kind: input, shape index: {}]
  %s12 = inlined_call_operand.vmem [shape: bf16[32,64], index: 12, kind: input, shape index: {}]
  %s13 = inlined_call_operand.vmem [shape: f32[1,64], index: 13, kind: input, shape index: {}]
  %s14 = inlined_call_operand.vmem [shape: bf16[64,32], index: 14, kind: input, shape index: {}]
  %s15 = inlined_call_operand.vmem [shape: f32[1,32], index: 15, kind: input, shape index: {}]
  %s16 = inlined_call_operand.hbm [shape: f32[16,128], index: 16, kind: output, shape index: {0}]
  %s17 = inlined_call_operand.hbm [shape: f32[16,128], index: 17, kind: output, shape index: {1}]
  %18 = xla_tuple %s16, %s17
  %s19 = sld [smem:[#allocation0]]
  $region113: #{tpu_custom_call.1} parent=0
    _
  %s21 = ssub.s32 1, %s19
  %s22 = scalar_select 0, %s21, %s19
  $region1: #{tpu_custom_call.1} parent=0
    #allocation2 [shape = 'u8[4096]{0}', space=vmem, size = 0x1000, scoped, tag = 'input window, operand 0']
    #allocation3 [shape = 's32[2]{0}', space=sflag, size = 0x8, scoped, tag = 'scoped memory for tpu_custom_call.1']
    #allocation4 [shape = 's32[2]{0}', space=sflag, size = 0x8, scoped, tag = 'scoped memory for tpu_custom_call.1']
    #allocation5 [shape = 'u8[4096]{0}', space=vmem, size = 0x1000, scoped, tag = 'input window, operand 1']
    #allocation6 [shape = 's32[2]{0}', space=sflag, size = 0x8, scoped, tag = 'scoped memory for tpu_custom_call.1']
    #allocation7 [shape = 'u8[8192]{0}', space=vmem, size = 0x2000, scoped, tag = 'output window, operand 0']
    #allocation8 [shape = 'u8[8192]{0}', space=vmem, size = 0x2000, scoped, tag = 'output window, operand 1']
    #allocation9 [shape = 's32[2]{0}', space=sflag, size = 0x8, scoped, tag = 'scoped memory for tpu_custom_call.1']
    %23 = vsyncpa [#allocation3], 0
    %s24 = scalar_lea.sflag [#allocation3], 1
    %25 = vsyncpa %s24, 0
    %26 = vsyncpa [#allocation6], 0
    %s27 = scalar_lea.sflag [#allocation6], 1
    %28 = vsyncpa %s27, 0
    %29 = vsyncpa [#allocation4], 0
    %s30 = scalar_lea.sflag [#allocation4], 1
    %31 = vsyncpa %s30, 0
    %32 = vsyncpa [#allocation9], 0
    %s33 = scalar_lea.sflag [#allocation9], 1
    %34 = vsyncpa %s33, 0
    loop: start=0, step=1, limit=4
    $region2: #{tpu_custom_call.1} parent=1 // loop_pre_header
      _
    $region3: #{tpu_custom_call.1} parent=1 // loop_header
      %s36 = sphi 0, %s40
      %p37 = scmp.ge.s32.totalorder %s36, 4
      %s46 = sphi 0, %s48
      %s49 = sphi 0, %s46
      %s50 = sphi 0, %s49
      %s66 = sphi 0, %s50
      %s72 = sphi 0, %s74
      %s75 = sphi 0, %s72
      %s76 = sphi 0, %s75
      %s92 = sphi 0, %s76
      %s96 = sphi 0, %s96
      %s98 = sphi 0, %s96
      %s99 = sphi 0, %s98
      %s113 = sphi 0, %s99
      %s117 = sphi 0, %s117
      %s119 = sphi 0, %s117
      %s120 = sphi 0, %s119
      %s134 = sphi 0, %s120
      %s138 = sphi 0, %s138
      %s140 = sphi 0, %s138
      %s141 = sphi 0, %s140
      %s155 = sphi 0, %s141
      %s159 = sphi 0, %s159
      %s161 = sphi 0, %s159
      %s162 = sphi 0, %s161
      %s176 = sphi 0, %s162
      %s180 = sphi 0, %s180
      %s182 = sphi 0, %s180
      %s183 = sphi 0, %s182
      %s197 = sphi 0, %s183
      %s201 = sphi 0, %s201
      %s203 = sphi 0, %s201
      %s204 = sphi 0, %s203
      %s218 = sphi 0, %s204
      %s222 = sphi 0, %s222
      %s224 = sphi 0, %s222
      %s225 = sphi 0, %s224
      %s239 = sphi 0, %s225
      %s243 = sphi 0, %s243
      %s245 = sphi 0, %s243
      %s246 = sphi 0, %s245
      %s260 = sphi 0, %s246
      %s264 = sphi 0, %s264
      %s266 = sphi 0, %s264
      %s267 = sphi 0, %s266
      %s281 = sphi 0, %s267
      %s285 = sphi 0, %s285
      %s287 = sphi 0, %s285
      %s288 = sphi 0, %s287
      %s302 = sphi 0, %s288
      %s306 = sphi 0, %s306
      %s308 = sphi 0, %s306
      %s309 = sphi 0, %s308
      %s323 = sphi 0, %s309
      %s327 = sphi 0, %s327
      %s329 = sphi 0, %s327
      %s330 = sphi 0, %s329
      %s344 = sphi 0, %s330
      %s348 = sphi 0, %s348
      %s350 = sphi 0, %s348
      %s351 = sphi 0, %s350
      %s365 = sphi 0, %s351
      %s369 = sphi 0, %s369
      %s371 = sphi 0, %s369
      %s372 = sphi 0, %s371
      %s386 = sphi 0, %s372
      %s392 = sphi 0, %s394
      %s395 = sphi 0, %s392
      %s396 = sphi 0, %s395
      %s412 = sphi 0, %s396
      %s418 = sphi 0, %s420
      %s421 = sphi 0, %s418
      %s422 = sphi 0, %s421
      %s438 = sphi 0, %s422
    $region4: #{tpu_custom_call.1} parent=1 // loop_header_branch
      %39 = sbr.rel (%p37) target = $region8
    $region5: #{tpu_custom_call.1} parent=1 // loop_body
      %s41 = ssub.s32 %s36, 1
      %s42 = ssub.s32 %s36, 2
      %s43 = sadd.s32 %s36, 1
      %s44 = ssub.s32 %s36, %s43
      %p45 = scmp.eq.s32.totalorder %s44, 0
      %s47 = sadd.s32 %s46, 1
      %s48 = scalar_select %p45, %s46, %s47
      %p51 = pneg %p45
      %p52 = scmp.eq.s32.totalorder %s36, 1
      %p53 = por %p51, %p52
      %p54 = scmp.ne.s32.totalorder %s46, %s49
      %p55 = scmp.eq.s32.totalorder %s36, 0
      %p56 = por %p54, %p55
      %p57 = scmp.ne.s32.totalorder %s46, %s49
      %p58 = scmp.eq.s32.totalorder %s41, 1
      %p59 = por %p57, %p58
      %p60 = scmp.ne.s32.totalorder %s49, %s50
      %p61 = scmp.eq.s32.totalorder %s41, 0
      %p62 = por %p60, %p61
      %p63 = scmp.ne.s32.totalorder %s49, %s50
      %p64 = scmp.eq.s32.totalorder %s42, 1
      %p65 = por %p63, %p64
      %p67 = scmp.ne.s32.totalorder %s50, %s66
      %p68 = scmp.eq.s32.totalorder %s42, 0
      %p69 = por %p67, %p68
      %s70 = ssub.s32 %s36, %s43
      %p71 = scmp.eq.s32.totalorder %s70, 0
      %s73 = sadd.s32 %s72, 1
      %s74 = scalar_select %p71, %s72, %s73
      %p77 = pneg %p71
      %p78 = scmp.eq.s32.totalorder %s36, 1
      %p79 = por %p77, %p78
      %p80 = scmp.ne.s32.totalorder %s72, %s75
      %p81 = scmp.eq.s32.totalorder %s36, 0
      %p82 = por %p80, %p81
      %p83 = scmp.ne.s32.totalorder %s72, %s75
      %p84 = scmp.eq.s32.totalorder %s41, 1
      %p85 = por %p83, %p84
      %p86 = scmp.ne.s32.totalorder %s75, %s76
      %p87 = scmp.eq.s32.totalorder %s41, 0
      %p88 = por %p86, %p87
      %p89 = scmp.ne.s32.totalorder %s75, %s76
      %p90 = scmp.eq.s32.totalorder %s42, 1
      %p91 = por %p89, %p90
      %p93 = scmp.ne.s32.totalorder %s76, %s92
      %p94 = scmp.eq.s32.totalorder %s42, 0
      %p95 = por %p93, %p94
      %s97 = sadd.s32 %s96, 1
      %p100 = scmp.eq.s32.totalorder %s36, 1
      %p101 = scmp.ne.s32.totalorder %s96, %s98
      %p102 = scmp.eq.s32.totalorder %s36, 0
      %p103 = por %p101, %p102
      %p104 = scmp.ne.s32.totalorder %s96, %s98
      %p105 = scmp.eq.s32.totalorder %s41, 1
      %p106 = por %p104, %p105
      %p107 = scmp.ne.s32.totalorder %s98, %s99
      %p108 = scmp.eq.s32.totalorder %s41, 0
      %p109 = por %p107, %p108
      %p110 = scmp.ne.s32.totalorder %s98, %s99
      %p111 = scmp.eq.s32.totalorder %s42, 1
      %p112 = por %p110, %p111
      %p114 = scmp.ne.s32.totalorder %s99, %s113
      %p115 = scmp.eq.s32.totalorder %s42, 0
      %p116 = por %p114, %p115
      %s118 = sadd.s32 %s117, 1
      %p121 = scmp.eq.s32.totalorder %s36, 1
      %p122 = scmp.ne.s32.totalorder %s117, %s119
      %p123 = scmp.eq.s32.totalorder %s36, 0
      %p124 = por %p122, %p123
      %p125 = scmp.ne.s32.totalorder %s117, %s119
      %p126 = scmp.eq.s32.totalorder %s41, 1
      %p127 = por %p125, %p126
      %p128 = scmp.ne.s32.totalorder %s119, %s120
      %p129 = scmp.eq.s32.totalorder %s41, 0
      %p130 = por %p128, %p129
      %p131 = scmp.ne.s32.totalorder %s119, %s120
      %p132 = scmp.eq.s32.totalorder %s42, 1
      %p133 = por %p131, %p132
      %p135 = scmp.ne.s32.totalorder %s120, %s134
      %p136 = scmp.eq.s32.totalorder %s42, 0
      %p137 = por %p135, %p136
      %s139 = sadd.s32 %s138, 1
      %p142 = scmp.eq.s32.totalorder %s36, 1
      %p143 = scmp.ne.s32.totalorder %s138, %s140
      %p144 = scmp.eq.s32.totalorder %s36, 0
      %p145 = por %p143, %p144
      %p146 = scmp.ne.s32.totalorder %s138, %s140
      %p147 = scmp.eq.s32.totalorder %s41, 1
      %p148 = por %p146, %p147
      %p149 = scmp.ne.s32.totalorder %s140, %s141
      %p150 = scmp.eq.s32.totalorder %s41, 0
      %p151 = por %p149, %p150
      %p152 = scmp.ne.s32.totalorder %s140, %s141
      %p153 = scmp.eq.s32.totalorder %s42, 1
      %p154 = por %p152, %p153
      %p156 = scmp.ne.s32.totalorder %s141, %s155
      %p157 = scmp.eq.s32.totalorder %s42, 0
      %p158 = por %p156, %p157
      %s160 = sadd.s32 %s159, 1
      %p163 = scmp.eq.s32.totalorder %s36, 1
      %p164 = scmp.ne.s32.totalorder %s159, %s161
      %p165 = scmp.eq.s32.totalorder %s36, 0
      %p166 = por %p164, %p165
      %p167 = scmp.ne.s32.totalorder %s159, %s161
      %p168 = scmp.eq.s32.totalorder %s41, 1
      %p169 = por %p167, %p168
      %p170 = scmp.ne.s32.totalorder %s161, %s162
      %p171 = scmp.eq.s32.totalorder %s41, 0
      %p172 = por %p170, %p171
      %p173 = scmp.ne.s32.totalorder %s161, %s162
      %p174 = scmp.eq.s32.totalorder %s42, 1
      %p175 = por %p173, %p174
      %p177 = scmp.ne.s32.totalorder %s162, %s176
      %p178 = scmp.eq.s32.totalorder %s42, 0
      %p179 = por %p177, %p178
      %s181 = sadd.s32 %s180, 1
      %p184 = scmp.eq.s32.totalorder %s36, 1
      %p185 = scmp.ne.s32.totalorder %s180, %s182
      %p186 = scmp.eq.s32.totalorder %s36, 0
      %p187 = por %p185, %p186
      %p188 = scmp.ne.s32.totalorder %s180, %s182
      %p189 = scmp.eq.s32.totalorder %s41, 1
      %p190 = por %p188, %p189
      %p191 = scmp.ne.s32.totalorder %s182, %s183
      %p192 = scmp.eq.s32.totalorder %s41, 0
      %p193 = por %p191, %p192
      %p194 = scmp.ne.s32.totalorder %s182, %s183
      %p195 = scmp.eq.s32.totalorder %s42, 1
      %p196 = por %p194, %p195
      %p198 = scmp.ne.s32.totalorder %s183, %s197
      %p199 = scmp.eq.s32.totalorder %s42, 0
      %p200 = por %p198, %p199
      %s202 = sadd.s32 %s201, 1
      %p205 = scmp.eq.s32.totalorder %s36, 1
      %p206 = scmp.ne.s32.totalorder %s201, %s203
      %p207 = scmp.eq.s32.totalorder %s36, 0
      %p208 = por %p206, %p207
      %p209 = scmp.ne.s32.totalorder %s201, %s203
      %p210 = scmp.eq.s32.totalorder %s41, 1
      %p211 = por %p209, %p210
      %p212 = scmp.ne.s32.totalorder %s203, %s204
      %p213 = scmp.eq.s32.totalorder %s41, 0
      %p214 = por %p212, %p213
      %p215 = scmp.ne.s32.totalorder %s203, %s204
      %p216 = scmp.eq.s32.totalorder %s42, 1
      %p217 = por %p215, %p216
      %p219 = scmp.ne.s32.totalorder %s204, %s218
      %p220 = scmp.eq.s32.totalorder %s42, 0
      %p221 = por %p219, %p220
      %s223 = sadd.s32 %s222, 1
      %p226 = scmp.eq.s32.totalorder %s36, 1
      %p227 = scmp.ne.s32.totalorder %s222, %s224
      %p228 = scmp.eq.s32.totalorder %s36, 0
      %p229 = por %p227, %p228
      %p230 = scmp.ne.s32.totalorder %s222, %s224
      %p231 = scmp.eq.s32.totalorder %s41, 1
      %p232 = por %p230, %p231
      %p233 = scmp.ne.s32.totalorder %s224, %s225
      %p234 = scmp.eq.s32.totalorder %s41, 0
      %p235 = por %p233, %p234
      %p236 = scmp.ne.s32.totalorder %s224, %s225
      %p237 = scmp.eq.s32.totalorder %s42, 1
      %p238 = por %p236, %p237
      %p240 = scmp.ne.s32.totalorder %s225, %s239
      %p241 = scmp.eq.s32.totalorder %s42, 0
      %p242 = por %p240, %p241
      %s244 = sadd.s32 %s243, 1
      %p247 = scmp.eq.s32.totalorder %s36, 1
      %p248 = scmp.ne.s32.totalorder %s243, %s245
      %p249 = scmp.eq.s32.totalorder %s36, 0
      %p250 = por %p248, %p249
      %p251 = scmp.ne.s32.totalorder %s243, %s245
      %p252 = scmp.eq.s32.totalorder %s41, 1
      %p253 = por %p251, %p252
      %p254 = scmp.ne.s32.totalorder %s245, %s246
      %p255 = scmp.eq.s32.totalorder %s41, 0
      %p256 = por %p254, %p255
      %p257 = scmp.ne.s32.totalorder %s245, %s246
      %p258 = scmp.eq.s32.totalorder %s42, 1
      %p259 = por %p257, %p258
      %p261 = scmp.ne.s32.totalorder %s246, %s260
      %p262 = scmp.eq.s32.totalorder %s42, 0
      %p263 = por %p261, %p262
      %s265 = sadd.s32 %s264, 1
      %p268 = scmp.eq.s32.totalorder %s36, 1
      %p269 = scmp.ne.s32.totalorder %s264, %s266
      %p270 = scmp.eq.s32.totalorder %s36, 0
      %p271 = por %p269, %p270
      %p272 = scmp.ne.s32.totalorder %s264, %s266
      %p273 = scmp.eq.s32.totalorder %s41, 1
      %p274 = por %p272, %p273
      %p275 = scmp.ne.s32.totalorder %s266, %s267
      %p276 = scmp.eq.s32.totalorder %s41, 0
      %p277 = por %p275, %p276
      %p278 = scmp.ne.s32.totalorder %s266, %s267
      %p279 = scmp.eq.s32.totalorder %s42, 1
      %p280 = por %p278, %p279
      %p282 = scmp.ne.s32.totalorder %s267, %s281
      %p283 = scmp.eq.s32.totalorder %s42, 0
      %p284 = por %p282, %p283
      %s286 = sadd.s32 %s285, 1
      %p289 = scmp.eq.s32.totalorder %s36, 1
      %p290 = scmp.ne.s32.totalorder %s285, %s287
      %p291 = scmp.eq.s32.totalorder %s36, 0
      %p292 = por %p290, %p291
      %p293 = scmp.ne.s32.totalorder %s285, %s287
      %p294 = scmp.eq.s32.totalorder %s41, 1
      %p295 = por %p293, %p294
      %p296 = scmp.ne.s32.totalorder %s287, %s288
      %p297 = scmp.eq.s32.totalorder %s41, 0
      %p298 = por %p296, %p297
      %p299 = scmp.ne.s32.totalorder %s287, %s288
      %p300 = scmp.eq.s32.totalorder %s42, 1
      %p301 = por %p299, %p300
      %p303 = scmp.ne.s32.totalorder %s288, %s302
      %p304 = scmp.eq.s32.totalorder %s42, 0
      %p305 = por %p303, %p304
      %s307 = sadd.s32 %s306, 1
      %p310 = scmp.eq.s32.totalorder %s36, 1
      %p311 = scmp.ne.s32.totalorder %s306, %s308
      %p312 = scmp.eq.s32.totalorder %s36, 0
      %p313 = por %p311, %p312
      %p314 = scmp.ne.s32.totalorder %s306, %s308
      %p315 = scmp.eq.s32.totalorder %s41, 1
      %p316 = por %p314, %p315
      %p317 = scmp.ne.s32.totalorder %s308, %s309
      %p318 = scmp.eq.s32.totalorder %s41, 0
      %p319 = por %p317, %p318
      %p320 = scmp.ne.s32.totalorder %s308, %s309
      %p321 = scmp.eq.s32.totalorder %s42, 1
      %p322 = por %p320, %p321
      %p324 = scmp.ne.s32.totalorder %s309, %s323
      %p325 = scmp.eq.s32.totalorder %s42, 0
      %p326 = por %p324, %p325
      %s328 = sadd.s32 %s327, 1
      %p331 = scmp.eq.s32.totalorder %s36, 1
      %p332 = scmp.ne.s32.totalorder %s327, %s329
      %p333 = scmp.eq.s32.totalorder %s36, 0
      %p334 = por %p332, %p333
      %p335 = scmp.ne.s32.totalorder %s327, %s329
      %p336 = scmp.eq.s32.totalorder %s41, 1
      %p337 = por %p335, %p336
      %p338 = scmp.ne.s32.totalorder %s329, %s330
      %p339 = scmp.eq.s32.totalorder %s41, 0
      %p340 = por %p338, %p339
      %p341 = scmp.ne.s32.totalorder %s329, %s330
      %p342 = scmp.eq.s32.totalorder %s42, 1
      %p343 = por %p341, %p342
      %p345 = scmp.ne.s32.totalorder %s330, %s344
      %p346 = scmp.eq.s32.totalorder %s42, 0
      %p347 = por %p345, %p346
      %s349 = sadd.s32 %s348, 1
      %p352 = scmp.eq.s32.totalorder %s36, 1
      %p353 = scmp.ne.s32.totalorder %s348, %s350
      %p354 = scmp.eq.s32.totalorder %s36, 0
      %p355 = por %p353, %p354
      %p356 = scmp.ne.s32.totalorder %s348, %s350
      %p357 = scmp.eq.s32.totalorder %s41, 1
      %p358 = por %p356, %p357
      %p359 = scmp.ne.s32.totalorder %s350, %s351
      %p360 = scmp.eq.s32.totalorder %s41, 0
      %p361 = por %p359, %p360
      %p362 = scmp.ne.s32.totalorder %s350, %s351
      %p363 = scmp.eq.s32.totalorder %s42, 1
      %p364 = por %p362, %p363
      %p366 = scmp.ne.s32.totalorder %s351, %s365
      %p367 = scmp.eq.s32.totalorder %s42, 0
      %p368 = por %p366, %p367
      %s370 = sadd.s32 %s369, 1
      %p373 = scmp.eq.s32.totalorder %s36, 1
      %p374 = scmp.ne.s32.totalorder %s369, %s371
      %p375 = scmp.eq.s32.totalorder %s36, 0
      %p376 = por %p374, %p375
      %p377 = scmp.ne.s32.totalorder %s369, %s371
      %p378 = scmp.eq.s32.totalorder %s41, 1
      %p379 = por %p377, %p378
      %p380 = scmp.ne.s32.totalorder %s371, %s372
      %p381 = scmp.eq.s32.totalorder %s41, 0
      %p382 = por %p380, %p381
      %p383 = scmp.ne.s32.totalorder %s371, %s372
      %p384 = scmp.eq.s32.totalorder %s42, 1
      %p385 = por %p383, %p384
      %p387 = scmp.ne.s32.totalorder %s372, %s386
      %p388 = scmp.eq.s32.totalorder %s42, 0
      %p389 = por %p387, %p388
      %s390 = ssub.s32 %s36, %s43
      %p391 = scmp.eq.s32.totalorder %s390, 0
      %s393 = sadd.s32 %s392, 1
      %s394 = scalar_select %p391, %s392, %s393
      %p397 = pneg %p391
      %p398 = scmp.eq.s32.totalorder %s36, 1
      %p399 = por %p397, %p398
      %p400 = scmp.ne.s32.totalorder %s392, %s395
      %p401 = scmp.eq.s32.totalorder %s36, 0
      %p402 = por %p400, %p401
      %p403 = scmp.ne.s32.totalorder %s392, %s395
      %p404 = scmp.eq.s32.totalorder %s41, 1
      %p405 = por %p403, %p404
      %p406 = scmp.ne.s32.totalorder %s395, %s396
      %p407 = scmp.eq.s32.totalorder %s41, 0
      %p408 = por %p406, %p407
      %p409 = scmp.ne.s32.totalorder %s395, %s396
      %p410 = scmp.eq.s32.totalorder %s42, 1
      %p411 = por %p409, %p410
      %p413 = scmp.ne.s32.totalorder %s396, %s412
      %p414 = scmp.eq.s32.totalorder %s42, 0
      %p415 = por %p413, %p414
      %s416 = ssub.s32 %s36, %s43
      %p417 = scmp.eq.s32.totalorder %s416, 0
      %s419 = sadd.s32 %s418, 1
      %s420 = scalar_select %p417, %s418, %s419
      %p423 = pneg %p417
      %p424 = scmp.eq.s32.totalorder %s36, 1
      %p425 = por %p423, %p424
      %p426 = scmp.ne.s32.totalorder %s418, %s421
      %p427 = scmp.eq.s32.totalorder %s36, 0
      %p428 = por %p426, %p427
      %p429 = scmp.ne.s32.totalorder %s418, %s421
      %p430 = scmp.eq.s32.totalorder %s41, 1
      %p431 = por %p429, %p430
      %p432 = scmp.ne.s32.totalorder %s421, %s422
      %p433 = scmp.eq.s32.totalorder %s41, 0
      %p434 = por %p432, %p433
      %p435 = scmp.ne.s32.totalorder %s421, %s422
      %p436 = scmp.eq.s32.totalorder %s42, 1
      %p437 = por %p435, %p436
      %p439 = scmp.ne.s32.totalorder %s422, %s438
      %p440 = scmp.eq.s32.totalorder %s42, 0
      %p441 = por %p439, %p440
      %p442 = scmp.le.s32.totalorder 1, %s36
      %p443 = scmp.lt.s32.totalorder %s36, 3
      %p444 = pnand %p442, %p443
      %p445 = pneg %p444
      // Predicated region
      $region9: #{tpu_custom_call.1} parent=5 // pred_check
        _
      $region10: #{tpu_custom_call.1} parent=5 // pred_check_branch
        %447 = sbr.rel (%p444) target = $region12
      $region11: #{tpu_custom_call.1} parent=5 // pred_region
        %s448 = ssub.s32 %s36, 1
        // Predicated region
        $region13: #{tpu_custom_call.1} parent=11 // pred_check
          %p449 = pneg %p109
        $region14: #{tpu_custom_call.1} parent=11 // pred_check_branch
          %451 = sbr.rel (%p449) target = $region16
        $region15: #{tpu_custom_call.1} parent=11 // pred_region
          _
        $region16: #{tpu_custom_call.1} parent=11 // pred_fallthru
          _
        // Predicated region
        $region17: #{tpu_custom_call.1} parent=11 // pred_check
          %p452 = pneg %p130
        $region18: #{tpu_custom_call.1} parent=11 // pred_check_branch
          %454 = sbr.rel (%p452) target = $region20
        $region19: #{tpu_custom_call.1} parent=11 // pred_region
          _
        $region20: #{tpu_custom_call.1} parent=11 // pred_fallthru
          _
        // Predicated region
        $region21: #{tpu_custom_call.1} parent=11 // pred_check
          %p455 = pneg %p151
        $region22: #{tpu_custom_call.1} parent=11 // pred_check_branch
          %457 = sbr.rel (%p455) target = $region24
        $region23: #{tpu_custom_call.1} parent=11 // pred_region
          _
        $region24: #{tpu_custom_call.1} parent=11 // pred_fallthru
          _
        // Predicated region
        $region25: #{tpu_custom_call.1} parent=11 // pred_check
          %p458 = pneg %p172
        $region26: #{tpu_custom_call.1} parent=11 // pred_check_branch
          %460 = sbr.rel (%p458) target = $region28
        $region27: #{tpu_custom_call.1} parent=11 // pred_region
          _
        $region28: #{tpu_custom_call.1} parent=11 // pred_fallthru
          _
        // Predicated region
        $region29: #{tpu_custom_call.1} parent=11 // pred_check
          %p461 = pneg %p193
        $region30: #{tpu_custom_call.1} parent=11 // pred_check_branch
          %463 = sbr.rel (%p461) target = $region32
        $region31: #{tpu_custom_call.1} parent=11 // pred_region
          _
        $region32: #{tpu_custom_call.1} parent=11 // pred_fallthru
          _
        // Predicated region
        $region33: #{tpu_custom_call.1} parent=11 // pred_check
          %p464 = pneg %p214
        $region34: #{tpu_custom_call.1} parent=11 // pred_check_branch
          %466 = sbr.rel (%p464) target = $region36
        $region35: #{tpu_custom_call.1} parent=11 // pred_region
          _
        $region36: #{tpu_custom_call.1} parent=11 // pred_fallthru
          _
        // Predicated region
        $region37: #{tpu_custom_call.1} parent=11 // pred_check
          %p467 = pneg %p235
        $region38: #{tpu_custom_call.1} parent=11 // pred_check_branch
          %469 = sbr.rel (%p467) target = $region40
        $region39: #{tpu_custom_call.1} parent=11 // pred_region
          _
        $region40: #{tpu_custom_call.1} parent=11 // pred_fallthru
          _
        // Predicated region
        $region41: #{tpu_custom_call.1} parent=11 // pred_check
          %p470 = pneg %p256
        $region42: #{tpu_custom_call.1} parent=11 // pred_check_branch
          %472 = sbr.rel (%p470) target = $region44
        $region43: #{tpu_custom_call.1} parent=11 // pred_region
          _
        $region44: #{tpu_custom_call.1} parent=11 // pred_fallthru
          _
        // Predicated region
        $region45: #{tpu_custom_call.1} parent=11 // pred_check
          %p473 = pneg %p277
        $region46: #{tpu_custom_call.1} parent=11 // pred_check_branch
          %475 = sbr.rel (%p473) target = $region48
        $region47: #{tpu_custom_call.1} parent=11 // pred_region
          _
        $region48: #{tpu_custom_call.1} parent=11 // pred_fallthru
          _
        // Predicated region
        $region49: #{tpu_custom_call.1} parent=11 // pred_check
          %p476 = pneg %p298
        $region50: #{tpu_custom_call.1} parent=11 // pred_check_branch
          %478 = sbr.rel (%p476) target = $region52
        $region51: #{tpu_custom_call.1} parent=11 // pred_region
          _
        $region52: #{tpu_custom_call.1} parent=11 // pred_fallthru
          _
        // Predicated region
        $region53: #{tpu_custom_call.1} parent=11 // pred_check
          %p479 = pneg %p319
        $region54: #{tpu_custom_call.1} parent=11 // pred_check_branch
          %481 = sbr.rel (%p479) target = $region56
        $region55: #{tpu_custom_call.1} parent=11 // pred_region
          _
        $region56: #{tpu_custom_call.1} parent=11 // pred_fallthru
          _
        // Predicated region
        $region57: #{tpu_custom_call.1} parent=11 // pred_check
          %p482 = pneg %p340
        $region58: #{tpu_custom_call.1} parent=11 // pred_check_branch
          %484 = sbr.rel (%p482) target = $region60
        $region59: #{tpu_custom_call.1} parent=11 // pred_region
          _
        $region60: #{tpu_custom_call.1} parent=11 // pred_fallthru
          _
        // Predicated region
        $region61: #{tpu_custom_call.1} parent=11 // pred_check
          %p485 = pneg %p361
        $region62: #{tpu_custom_call.1} parent=11 // pred_check_branch
          %487 = sbr.rel (%p485) target = $region64
        $region63: #{tpu_custom_call.1} parent=11 // pred_region
          _
        $region64: #{tpu_custom_call.1} parent=11 // pred_fallthru
          _
        // Predicated region
        $region65: #{tpu_custom_call.1} parent=11 // pred_check
          %p488 = pneg %p382
        $region66: #{tpu_custom_call.1} parent=11 // pred_check_branch
          %490 = sbr.rel (%p488) target = $region68
        $region67: #{tpu_custom_call.1} parent=11 // pred_region
          _
        $region68: #{tpu_custom_call.1} parent=11 // pred_fallthru
          _
      $region12: #{tpu_custom_call.1} parent=5 // pred_fallthru
        _
      %p491 = scmp.lt.s32.totalorder %s36, 2
      // Predicated region
      $region69: #{tpu_custom_call.1} parent=5 // pred_check
        %p492 = pneg %p491
      $region70: #{tpu_custom_call.1} parent=5 // pred_check_branch
        %494 = sbr.rel (%p492) target = $region72
      $region71: #{tpu_custom_call.1} parent=5 // pred_region
        // Predicated region
        $region73: #{tpu_custom_call.1} parent=71 // pred_check
          %p495 = pneg %p56
        $region74: #{tpu_custom_call.1} parent=71 // pred_check_branch
          %497 = sbr.rel (%p495) target = $region76
        $region75: #{tpu_custom_call.1} parent=71 // pred_region
          %s498 = sand.u32 %s46, 1
          %s499 = scalar_lea.sflag [#allocation3], %s498
          %s500 = sand.u32 %s46, 1
          %s501 = smul.addr %s500, 4
          %s502 = scalar_lea.vmem [#allocation2], %s501
          %s504 = ssub.s32 64, 64
          %505 = vsyncadd %s499, %s504
          %s506 = smul.addr %s36, 64
          %s507 = scalar_lea.hbm %s0, %s506
          %s509 = sshll.u32 %s502, 4
          %s510 = int_to_ptr.vmem [resolvable:$true] %s509
          %512 = dma.hbm_to_vmem [thread:$0]  %s507, 64, %s510, %s499
        $region76: #{tpu_custom_call.1} parent=71 // pred_fallthru
          _
        // Predicated region
        $region77: #{tpu_custom_call.1} parent=71 // pred_check
          %p513 = pneg %p82
        $region78: #{tpu_custom_call.1} parent=71 // pred_check_branch
          %515 = sbr.rel (%p513) target = $region80
        $region79: #{tpu_custom_call.1} parent=71 // pred_region
          %s516 = sand.u32 %s72, 1
          %s517 = scalar_lea.sflag [#allocation6], %s516
          %s518 = sand.u32 %s72, 1
          %s519 = smul.addr %s518, 4
          %s520 = scalar_lea.vmem [#allocation5], %s519
          %s522 = ssub.s32 64, 64
          %523 = vsyncadd %s517, %s522
          %s524 = smul.addr %s36, 64
          %s525 = scalar_lea.hbm %s1, %s524
          %s527 = sshll.u32 %s520, 4
          %s528 = int_to_ptr.vmem [resolvable:$true] %s527
          %530 = dma.hbm_to_vmem [thread:$0]  %s525, 64, %s528, %s517
        $region80: #{tpu_custom_call.1} parent=71 // pred_fallthru
          _
      $region72: #{tpu_custom_call.1} parent=5 // pred_fallthru
        _
      %p531 = scmp.le.s32.totalorder 1, %s36
      %p532 = scmp.lt.s32.totalorder %s36, 3
      %p533 = pnand %p531, %p532
      %p534 = pneg %p533
      // Predicated region
      $region81: #{tpu_custom_call.1} parent=5 // pred_check
        _
      $region82: #{tpu_custom_call.1} parent=5 // pred_check_branch
        %536 = sbr.rel (%p533) target = $region84
      $region83: #{tpu_custom_call.1} parent=5 // pred_region
        %s537 = ssub.s32 %s36, 1
        %s538 = sand.u32 %s49, 1
        %s539 = scalar_lea.sflag [#allocation3], %s538
        %s540 = sand.u32 %s49, 1
        %s541 = smul.addr %s540, 4
        %s542 = scalar_lea.vmem [#allocation2], %s541
        // Predicated region
        $region85: #{tpu_custom_call.1} parent=83 // pred_check
          %p543 = pneg %p62
        $region86: #{tpu_custom_call.1} parent=83 // pred_check_branch
          %545 = sbr.rel (%p543) target = $region88
        $region87: #{tpu_custom_call.1} parent=83 // pred_region
          %546 = dma.done %s539, 64
        $region88: #{tpu_custom_call.1} parent=83 // pred_fallthru
          _
        %s547 = sand.u32 %s75, 1
        %s548 = scalar_lea.sflag [#allocation6], %s547
        %s549 = sand.u32 %s75, 1
        %s550 = smul.addr %s549, 4
        %s551 = scalar_lea.vmem [#allocation5], %s550
        // Predicated region
        $region89: #{tpu_custom_call.1} parent=83 // pred_check
          %p552 = pneg %p88
        $region90: #{tpu_custom_call.1} parent=83 // pred_check_branch
          %554 = sbr.rel (%p552) target = $region92
        $region91: #{tpu_custom_call.1} parent=83 // pred_region
          %555 = dma.done %s548, 64
        $region92: #{tpu_custom_call.1} parent=83 // pred_fallthru
          _
        %s556 = sand.u32 %s49, 1
        %s557 = scalar_lea.sflag [#allocation3], %s556
        %s558 = sand.u32 %s49, 1
        %s559 = smul.addr %s558, 4
        %s560 = scalar_lea.vmem [#allocation2], %s559
        %p561 = pneg %p62
        %p562 = pneg %p59
        %s563 = sand.u32 %s75, 1
        %s564 = scalar_lea.sflag [#allocation6], %s563
        %s565 = sand.u32 %s75, 1
        %s566 = smul.addr %s565, 4
        %s567 = scalar_lea.vmem [#allocation5], %s566
        %p568 = pneg %p88
        %p569 = pneg %p85
        %p570 = pneg %p109
        %p571 = pneg %p106
        %p572 = pneg %p130
        %p573 = pneg %p127
        %p574 = pneg %p151
        %p575 = pneg %p148
        %p576 = pneg %p172
        %p577 = pneg %p169
        %p578 = pneg %p193
        %p579 = pneg %p190
        %p580 = pneg %p214
        %p581 = pneg %p211
        %p582 = pneg %p235
        %p583 = pneg %p232
        %p584 = pneg %p256
        %p585 = pneg %p253
        %p586 = pneg %p277
        %p587 = pneg %p274
        %p588 = pneg %p298
        %p589 = pneg %p295
        %p590 = pneg %p319
        %p591 = pneg %p316
        %p592 = pneg %p340
        %p593 = pneg %p337
        %p594 = pneg %p361
        %p595 = pneg %p358
        %p596 = pneg %p382
        %p597 = pneg %p379
        %p598 = pneg %p408
        %p599 = pneg %p405
        %s600 = sand.u32 %s395, 1
        %s601 = scalar_lea.sflag [#allocation4], %s600
        %s602 = sand.u32 %s395, 1
        %s603 = smul.addr %s602, 8
        %s604 = scalar_lea.vmem [#allocation7], %s603
        %p605 = pneg %p434
        %p606 = pneg %p431
        %s607 = sand.u32 %s421, 1
        %s608 = scalar_lea.sflag [#allocation9], %s607
        %s609 = sand.u32 %s421, 1
        %s610 = smul.addr %s609, 8
        %s611 = scalar_lea.vmem [#allocation8], %s610
        %v613 = vld [vmem:[%s542] sm:$0xf]
        %v614 = vld [vmem:[%s551] sm:$0xf]
        %v615 = vld [vmem:[%s2] sm:$0xf]
        %v616 = vld [vmem:[%s2 + $0x4] sm:$0xf]
        %v617 = vld [vmem:[%s2 + $0x8] sm:$0xf]
        %v618 = vld [vmem:[%s2 + $0xc] sm:$0xf]
        %v619 = vld [vmem:[%s3] sm:$0x1]
        %v621 = vlaneseq
        %v622 = vshrl.u32 %v621, 7
        %v623 = vsub.s32 0, %v622
        %v624 = vrot.slane %v619, %v623
        %v630 = vunpack.c.l.b16 %v615
        %v631 = vunpack.c.l.b16 %v616
        %v632 = vunpack.c.l.b16 %v617
        %v633 = vunpack.c.l.b16 %v618
        %v634 = vpack.c.b16 %v631, %v630
        %v635 = vpack.c.b16 %v633, %v632
        %vm638 = vcmask 261120
        %v640 = vsel %vm638, %v613, 0
        %642 = vmatprep.subr.bf16.mxu0 0
        %643 = vmatpush1.bf16.msra.mxu0 %v634
        %644 = vmatprep.subr.bf16.mxu0 0
        %645 = vmatpush1.bf16.msra.mxu0 %v635
        %646 = vmatprep.subr.bf16.mxu0 0
        %647 = vmatpush1.bf16.msra.mxu0 0
        %648 = vmatprep.subr.bf16.mxu0 0
        %649 = vmatpush1.bf16.msra.mxu0 0
        %650 = vmatprep.subr.bf16.mxu0 0
        %651 = vmatpush1.bf16.msra.mxu0 0
        %652 = vmatprep.subr.bf16.mxu0 0
        %653 = vmatpush1.bf16.msra.mxu0 0
        %654 = vmatprep.subr.bf16.mxu0 0
        %655 = vmatpush1.bf16.msra.mxu0 0
        %656 = vmatprep.subr.bf16.mxu0 0
        %657 = vmatpush1.bf16.msra.mxu0 0
        %658 = vmatprep.subr.bf16.mxu0 0
        %659 = vmatpush1.bf16.msra.mxu0 0
        %660 = vmatprep.subr.bf16.mxu0 0
        %661 = vmatpush1.bf16.msra.mxu0 0
        %662 = vmatprep.subr.bf16.mxu0 0
        %663 = vmatpush1.bf16.msra.mxu0 0
        %664 = vmatprep.subr.bf16.mxu0 0
        %665 = vmatpush1.bf16.msra.mxu0 0
        %666 = vmatprep.subr.bf16.mxu0 0
        %667 = vmatpush1.bf16.msra.mxu0 0
        %668 = vmatprep.subr.bf16.mxu0 0
        %669 = vmatpush1.bf16.msra.mxu0 0
        %670 = vmatprep.subr.bf16.mxu0 0
        %671 = vmatpush1.bf16.msra.mxu0 0
        %672 = vmatprep.subr.bf16.mxu0 0
        %673 = vmatpush1.bf16.msra.mxu0 0
        %674 = vmatprep.mubr.bf16.mxu0 0
        %675 = vmatmul.mubr.bf16.gmra.mrb[0].mxu0 %v640
        %v676 = vpop.f32.mrb[0].mxu0
        %v677 = vadd.f32 %v624, %v676
        %v678 = vpop.f32.mrb[0].mxu0
        %v679 = vpop.f32.mrb[0].mxu0
        %v680 = vpop.f32.mrb[0].mxu0
        %681 = vdwg.mxu0
        %v682 = vld [vmem:[%s4] sm:$0xf]
        %v683 = vld [vmem:[%s4 + $0x4] sm:$0xf]
        %v684 = vld [vmem:[%s4 + $0x8] sm:$0xf]
        %v685 = vld [vmem:[%s4 + $0xc] sm:$0xf]
        %v686 = vld [vmem:[%s5] sm:$0x1]
        %v688 = vlaneseq
        %v689 = vshrl.u32 %v688, 7
        %v690 = vsub.s32 0, %v689
        %v691 = vrot.slane %v686, %v690
        %v697 = vunpack.c.l.b16 %v682
        %v698 = vunpack.c.l.b16 %v683
        %v699 = vunpack.c.l.b16 %v684
        %v700 = vunpack.c.l.b16 %v685
        %v701 = vpack.c.b16 %v698, %v697
        %v702 = vpack.c.b16 %v700, %v699
        %v706 = vsel %vm638, %v614, 0
        %708 = vmatprep.subr.bf16.mxu0 0
        %709 = vmatpush1.bf16.msra.mxu0 %v701
        %710 = vmatprep.subr.bf16.mxu0 0
        %711 = vmatpush1.bf16.msra.mxu0 %v702
        %712 = vmatprep.subr.bf16.mxu0 0
        %713 = vmatpush1.bf16.msra.mxu0 0
        %714 = vmatprep.subr.bf16.mxu0 0
        %715 = vmatpush1.bf16.msra.mxu0 0
        %716 = vmatprep.subr.bf16.mxu0 0
        %717 = vmatpush1.bf16.msra.mxu0 0
        %718 = vmatprep.subr.bf16.mxu0 0
        %719 = vmatpush1.bf16.msra.mxu0 0
        %720 = vmatprep.subr.bf16.mxu0 0
        %721 = vmatpush1.bf16.msra.mxu0 0
        %722 = vmatprep.subr.bf16.mxu0 0
        %723 = vmatpush1.bf16.msra.mxu0 0
        %724 = vmatprep.subr.bf16.mxu0 0
        %725 = vmatpush1.bf16.msra.mxu0 0
        %726 = vmatprep.subr.bf16.mxu0 0
        %727 = vmatpush1.bf16.msra.mxu0 0
        %728 = vmatprep.subr.bf16.mxu0 0
        %729 = vmatpush1.bf16.msra.mxu0 0
        %730 = vmatprep.subr.bf16.mxu0 0
        %731 = vmatpush1.bf16.msra.mxu0 0
        %732 = vmatprep.subr.bf16.mxu0 0
        %733 = vmatpush1.bf16.msra.mxu0 0
        %734 = vmatprep.subr.bf16.mxu0 0
        %735 = vmatpush1.bf16.msra.mxu0 0
        %736 = vmatprep.subr.bf16.mxu0 0
        %737 = vmatpush1.bf16.msra.mxu0 0
        %738 = vmatprep.subr.bf16.mxu0 0
        %739 = vmatpush1.bf16.msra.mxu0 0
        %740 = vmatprep.mubr.bf16.mxu0 0
        %741 = vmatmul.mubr.bf16.gmra.mrb[0].mxu0 %v706
        %v742 = vpop.f32.mrb[0].mxu0
        %v743 = vadd.f32 %v691, %v742
        %v744 = vpop.f32.mrb[0].mxu0
        %v745 = vpop.f32.mrb[0].mxu0
        %v746 = vpop.f32.mrb[0].mxu0
        %747 = vdwg.mxu0
        %v748 = vpack.c.bf16 %v677, %v677
        %v749 = vpack.c.bf16 %v743, %v743
        %vm750 = vcmask 64512
        %v752 = vsel %vm750, %v748, 0
        %v755 = vsel %vm750, %v749, 0
        %757 = vmatprep.subr.bf16.mxu0 0
        %758 = vmatpush1.bf16.xpose.msra.mxu0 %v755
        %759 = vmatprep.subr.bf16.mxu0 0
        %760 = vmatpush1.bf16.xpose.msra.mxu0 0
        %761 = vmatprep.subr.bf16.mxu0 0
        %762 = vmatpush1.bf16.xpose.msra.mxu0 0
        %763 = vmatprep.subr.bf16.mxu0 0
        %764 = vmatpush1.bf16.xpose.msra.mxu0 0
        %765 = vmatprep.subr.bf16.mxu0 0
        %766 = vmatpush1.bf16.xpose.msra.mxu0 0
        %767 = vmatprep.subr.bf16.mxu0 0
        %768 = vmatpush1.bf16.xpose.msra.mxu0 0
        %769 = vmatprep.subr.bf16.mxu0 0
        %770 = vmatpush1.bf16.xpose.msra.mxu0 0
        %771 = vmatprep.subr.bf16.mxu0 0
        %772 = vmatpush1.bf16.xpose.msra.mxu0 0
        %773 = vmatprep.subr.bf16.mxu0 0
        %774 = vmatpush1.bf16.xpose.msra.mxu0 0
        %775 = vmatprep.subr.bf16.mxu0 0
        %776 = vmatpush1.bf16.xpose.msra.mxu0 0
        %777 = vmatprep.subr.bf16.mxu0 0
        %778 = vmatpush1.bf16.xpose.msra.mxu0 0
        %779 = vmatprep.subr.bf16.mxu0 0
        %780 = vmatpush1.bf16.xpose.msra.mxu0 0
        %781 = vmatprep.subr.bf16.mxu0 0
        %782 = vmatpush1.bf16.xpose.msra.mxu0 0
        %783 = vmatprep.subr.bf16.mxu0 0
        %784 = vmatpush1.bf16.xpose.msra.mxu0 0
        %785 = vmatprep.subr.bf16.mxu0 0
        %786 = vmatpush1.bf16.xpose.msra.mxu0 0
        %787 = vmatprep.subr.bf16.mxu0 0
        %788 = vmatpush1.bf16.xpose.msra.mxu0 0
        %789 = vmatprep.mubr.bf16.mxu0 0
        %790 = vmatmul.mubr.bf16.gmra.mrb[0].mxu0 %v752
        %v791 = vpop.f32.mrb[0].mxu0
        %v792 = vadd.f32 0.0, %v791
        %v793 = vpop.f32.mrb[0].mxu0
        %v794 = vpop.f32.mrb[0].mxu0
        %v795 = vpop.f32.mrb[0].mxu0
        %796 = vdwg.mxu0
        %v797 = vsel %vm750, %v792, -inf
        %798 = vmax.xlane.f32.xlu0 %v797
        %v799 = vpop.xlane.xlu0 %798
        %v800 = vsub.f32 %v792, %v799
        %v801 = vmul.f32 %v800, 1.442695
        %v802 = vpow.pop %v801
        %v803 = vsel %vm750, %v802, 0.0
        %804 = vadd.xlane.f32.xlu0 %v803
        %v805 = vpop.xlane.xlu0 %804
        %v806 = vrcp.pop %v805
        %v807 = vmul.f32 %v802, %v806
        %v808 = vadd.f32 %v807, 0.0
        %v809 = vpack.c.bf16 %v807, %v807
        %811 = vrot.lane.b32.xlu0 %v749, 96
        %v812 = vpop.permute.xlu0 %811
        %v814 = vsel %vm750, %v809, 0
        %vm816 = vcmask 1043456
        %v818 = vsel %vm816, %v812, 0
        %820 = vmatprep.subr.bf16.mxu0 0
        %821 = vmatpush1.bf16.msra.mxu0 %v818
        %822 = vmatprep.subr.bf16.mxu0 0
        %823 = vmatpush1.bf16.msra.mxu0 0
        %824 = vmatprep.subr.bf16.mxu0 0
        %825 = vmatpush1.bf16.msra.mxu0 0
        %826 = vmatprep.subr.bf16.mxu0 0
        %827 = vmatpush1.bf16.msra.mxu0 0
        %828 = vmatprep.subr.bf16.mxu0 0
        %829 = vmatpush1.bf16.msra.mxu0 0
        %830 = vmatprep.subr.bf16.mxu0 0
        %831 = vmatpush1.bf16.msra.mxu0 0
        %832 = vmatprep.subr.bf16.mxu0 0
        %833 = vmatpush1.bf16.msra.mxu0 0
        %834 = vmatprep.subr.bf16.mxu0 0
        %835 = vmatpush1.bf16.msra.mxu0 0
        %836 = vmatprep.subr.bf16.mxu0 0
        %837 = vmatpush1.bf16.msra.mxu0 0
        %838 = vmatprep.subr.bf16.mxu0 0
        %839 = vmatpush1.bf16.msra.mxu0 0
        %840 = vmatprep.subr.bf16.mxu0 0
        %841 = vmatpush1.bf16.msra.mxu0 0
        %842 = vmatprep.subr.bf16.mxu0 0
        %843 = vmatpush1.bf16.msra.mxu0 0
        %844 = vmatprep.subr.bf16.mxu0 0
        %845 = vmatpush1.bf16.msra.mxu0 0
        %846 = vmatprep.subr.bf16.mxu0 0
        %847 = vmatpush1.bf16.msra.mxu0 0
        %848 = vmatprep.subr.bf16.mxu0 0
        %849 = vmatpush1.bf16.msra.mxu0 0
        %850 = vmatprep.subr.bf16.mxu0 0
        %851 = vmatpush1.bf16.msra.mxu0 0
        %852 = vmatprep.mubr.bf16.mxu0 0
        %853 = vmatmul.mubr.bf16.gmra.mrb[0].mxu0 %v814
        %v854 = vpop.f32.mrb[0].mxu0
        %v855 = vadd.f32 0.0, %v854
        %v856 = vpop.f32.mrb[0].mxu0
        %v857 = vpop.f32.mrb[0].mxu0
        %v858 = vpop.f32.mrb[0].mxu0
        %859 = vdwg.mxu0
        %v860 = vpack.c.bf16 %v855, %v855
        %862 = vrot.lane.b32.xlu0 %v748, 120
        %v863 = vpop.permute.xlu0 %862
        %864 = vrot.lane.b32.xlu0 %v749, 120
        %v865 = vpop.permute.xlu0 %864
        %v867 = vsel %vm750, %v863, 0
        %v870 = vsel %vm750, %v865, 0
        %872 = vmatprep.subr.bf16.mxu0 0
        %873 = vmatpush1.bf16.xpose.msra.mxu0 %v870
        %874 = vmatprep.subr.bf16.mxu0 0
        %875 = vmatpush1.bf16.xpose.msra.mxu0 0
        %876 = vmatprep.subr.bf16.mxu0 0
        %877 = vmatpush1.bf16.xpose.msra.mxu0 0
        %878 = vmatprep.subr.bf16.mxu0 0
        %879 = vmatpush1.bf16.xpose.msra.mxu0 0
        %880 = vmatprep.subr.bf16.mxu0 0
        %881 = vmatpush1.bf16.xpose.msra.mxu0 0
        %882 = vmatprep.subr.bf16.mxu0 0
        %883 = vmatpush1.bf16.xpose.msra.mxu0 0
        %884 = vmatprep.subr.bf16.mxu0 0
        %885 = vmatpush1.bf16.xpose.msra.mxu0 0
        %886 = vmatprep.subr.bf16.mxu0 0
        %887 = vmatpush1.bf16.xpose.msra.mxu0 0
        %888 = vmatprep.subr.bf16.mxu0 0
        %889 = vmatpush1.bf16.xpose.msra.mxu0 0
        %890 = vmatprep.subr.bf16.mxu0 0
        %891 = vmatpush1.bf16.xpose.msra.mxu0 0
        %892 = vmatprep.subr.bf16.mxu0 0
        %893 = vmatpush1.bf16.xpose.msra.mxu0 0
        %894 = vmatprep.subr.bf16.mxu0 0
        %895 = vmatpush1.bf16.xpose.msra.mxu0 0
        %896 = vmatprep.subr.bf16.mxu0 0
        %897 = vmatpush1.bf16.xpose.msra.mxu0 0
        %898 = vmatprep.subr.bf16.mxu0 0
        %899 = vmatpush1.bf16.xpose.msra.mxu0 0
        %900 = vmatprep.subr.bf16.mxu0 0
        %901 = vmatpush1.bf16.xpose.msra.mxu0 0
        %902 = vmatprep.subr.bf16.mxu0 0
        %903 = vmatpush1.bf16.xpose.msra.mxu0 0
        %904 = vmatprep.mubr.bf16.mxu0 0
        %905 = vmatmul.mubr.bf16.gmra.mrb[0].mxu0 %v867
        %v906 = vpop.f32.mrb[0].mxu0
        %v907 = vadd.f32 0.0, %v906
        %v908 = vpop.f32.mrb[0].mxu0
        %v909 = vpop.f32.mrb[0].mxu0
        %v910 = vpop.f32.mrb[0].mxu0
        %911 = vdwg.mxu0
        %v912 = vsel %vm750, %v907, -inf
        %913 = vmax.xlane.f32.xlu0 %v912
        %v914 = vpop.xlane.xlu0 %913
        %v915 = vsub.f32 %v907, %v914
        %v916 = vmul.f32 %v915, 1.442695
        %v917 = vpow.pop %v916
        %v918 = vsel %vm750, %v917, 0.0
        %919 = vadd.xlane.f32.xlu0 %v918
        %v920 = vpop.xlane.xlu0 %919
        %v921 = vrcp.pop %v920
        %v922 = vmul.f32 %v917, %v921
        %v923 = vadd.f32 %v808, %v922
        %v924 = vpack.c.bf16 %v922, %v922
        %925 = vrot.lane.b32.xlu0 %v749, 88
        %v926 = vpop.permute.xlu0 %925
        %v928 = vsel %vm750, %v924, 0
        %v931 = vsel %vm816, %v926, 0
        %933 = vmatprep.subr.bf16.mxu0 0
        %934 = vmatpush1.bf16.msra.mxu0 %v931
        %935 = vmatprep.subr.bf16.mxu0 0
        %936 = vmatpush1.bf16.msra.mxu0 0
        %937 = vmatprep.subr.bf16.mxu0 0
        %938 = vmatpush1.bf16.msra.mxu0 0
        %939 = vmatprep.subr.bf16.mxu0 0
        %940 = vmatpush1.bf16.msra.mxu0 0
        %941 = vmatprep.subr.bf16.mxu0 0
        %942 = vmatpush1.bf16.msra.mxu0 0
        %943 = vmatprep.subr.bf16.mxu0 0
        %944 = vmatpush1.bf16.msra.mxu0 0
        %945 = vmatprep.subr.bf16.mxu0 0
        %946 = vmatpush1.bf16.msra.mxu0 0
        %947 = vmatprep.subr.bf16.mxu0 0
        %948 = vmatpush1.bf16.msra.mxu0 0
        %949 = vmatprep.subr.bf16.mxu0 0
        %950 = vmatpush1.bf16.msra.mxu0 0
        %951 = vmatprep.subr.bf16.mxu0 0
        %952 = vmatpush1.bf16.msra.mxu0 0
        %953 = vmatprep.subr.bf16.mxu0 0
        %954 = vmatpush1.bf16.msra.mxu0 0
        %955 = vmatprep.subr.bf16.mxu0 0
        %956 = vmatpush1.bf16.msra.mxu0 0
        %957 = vmatprep.subr.bf16.mxu0 0
        %958 = vmatpush1.bf16.msra.mxu0 0
        %959 = vmatprep.subr.bf16.mxu0 0
        %960 = vmatpush1.bf16.msra.mxu0 0
        %961 = vmatprep.subr.bf16.mxu0 0
        %962 = vmatpush1.bf16.msra.mxu0 0
        %963 = vmatprep.subr.bf16.mxu0 0
        %964 = vmatpush1.bf16.msra.mxu0 0
        %965 = vmatprep.mubr.bf16.mxu0 0
        %966 = vmatmul.mubr.bf16.gmra.mrb[0].mxu0 %v928
        %v967 = vpop.f32.mrb[0].mxu0
        %v968 = vadd.f32 0.0, %v967
        %v969 = vpop.f32.mrb[0].mxu0
        %v970 = vpop.f32.mrb[0].mxu0
        %v971 = vpop.f32.mrb[0].mxu0
        %972 = vdwg.mxu0
        %v973 = vpack.c.bf16 %v968, %v968
        %974 = vrot.lane.b32.xlu0 %v748, 112
        %v975 = vpop.permute.xlu0 %974
        %976 = vrot.lane.b32.xlu0 %v749, 112
        %v977 = vpop.permute.xlu0 %976
        %v979 = vsel %vm750, %v975, 0
        %v982 = vsel %vm750, %v977, 0
        %984 = vmatprep.subr.bf16.mxu0 0
        %985 = vmatpush1.bf16.xpose.msra.mxu0 %v982
        %986 = vmatprep.subr.bf16.mxu0 0
        %987 = vmatpush1.bf16.xpose.msra.mxu0 0
        %988 = vmatprep.subr.bf16.mxu0 0
        %989 = vmatpush1.bf16.xpose.msra.mxu0 0
        %990 = vmatprep.subr.bf16.mxu0 0
        %991 = vmatpush1.bf16.xpose.msra.mxu0 0
        %992 = vmatprep.subr.bf16.mxu0 0
        %993 = vmatpush1.bf16.xpose.msra.mxu0 0
        %994 = vmatprep.subr.bf16.mxu0 0
        %995 = vmatpush1.bf16.xpose.msra.mxu0 0
        %996 = vmatprep.subr.bf16.mxu0 0
        %997 = vmatpush1.bf16.xpose.msra.mxu0 0
        %998 = vmatprep.subr.bf16.mxu0 0
        %999 = vmatpush1.bf16.xpose.msra.mxu0 0
        %1000 = vmatprep.subr.bf16.mxu0 0
        %1001 = vmatpush1.bf16.xpose.msra.mxu0 0
        %1002 = vmatprep.subr.bf16.mxu0 0
        %1003 = vmatpush1.bf16.xpose.msra.mxu0 0
        %1004 = vmatprep.subr.bf16.mxu0 0
        %1005 = vmatpush1.bf16.xpose.msra.mxu0 0
        %1006 = vmatprep.subr.bf16.mxu0 0
        %1007 = vmatpush1.bf16.xpose.msra.mxu0 0
        %1008 = vmatprep.subr.bf16.mxu0 0
        %1009 = vmatpush1.bf16.xpose.msra.mxu0 0
        %1010 = vmatprep.subr.bf16.mxu0 0
        %1011 = vmatpush1.bf16.xpose.msra.mxu0 0
        %1012 = vmatprep.subr.bf16.mxu0 0
        %1013 = vmatpush1.bf16.xpose.msra.mxu0 0
        %1014 = vmatprep.subr.bf16.mxu0 0
        %1015 = vmatpush1.bf16.xpose.msra.mxu0 0
        %1016 = vmatprep.mubr.bf16.mxu0 0
        %1017 = vmatmul.mubr.bf16.gmra.mrb[0].mxu0 %v979
        %v1018 = vpop.f32.mrb[0].mxu0
        %v1019 = vadd.f32 0.0, %v1018
        %v1020 = vpop.f32.mrb[0].mxu0
        %v1021 = vpop.f32.mrb[0].mxu0
        %v1022 = vpop.f32.mrb[0].mxu0
        %1023 = vdwg.mxu0
        %v1024 = vsel %vm750, %v1019, -inf
        %1025 = vmax.xlane.f32.xlu0 %v1024
        %v1026 = vpop.xlane.xlu0 %1025
        %v1027 = vsub.f32 %v1019, %v1026
        %v1028 = vmul.f32 %v1027, 1.442695
        %v1029 = vpow.pop %v1028
        %v1030 = vsel %vm750, %v1029, 0.0
        %1031 = vadd.xlane.f32.xlu0 %v1030
        %v1032 = vpop.xlane.xlu0 %1031
        %v1033 = vrcp.pop %v1032
        %v1034 = vmul.f32 %v1029, %v1033
        %v1035 = vadd.f32 %v923, %v1034
        %v1036 = vpack.c.bf16 %v1034, %v1034
        %1037 = vrot.lane.b32.xlu0 %v749, 80
        %v1038 = vpop.permute.xlu0 %1037
        %v1040 = vsel %vm750, %v1036, 0
        %v1043 = vsel %vm816, %v1038, 0
        %1045 = vmatprep.subr.bf16.mxu0 0
        %1046 = vmatpush1.bf16.msra.mxu0 %v1043
        %1047 = vmatprep.subr.bf16.mxu0 0
        %1048 = vmatpush1.bf16.msra.mxu0 0
        %1049 = vmatprep.subr.bf16.mxu0 0
        %1050 = vmatpush1.bf16.msra.mxu0 0
        %1051 = vmatprep.subr.bf16.mxu0 0
        %1052 = vmatpush1.bf16.msra.mxu0 0
        %1053 = vmatprep.subr.bf16.mxu0 0
        %1054 = vmatpush1.bf16.msra.mxu0 0
        %1055 = vmatprep.subr.bf16.mxu0 0
        %1056 = vmatpush1.bf16.msra.mxu0 0
        %1057 = vmatprep.subr.bf16.mxu0 0
        %1058 = vmatpush1.bf16.msra.mxu0 0
        %1059 = vmatprep.subr.bf16.mxu0 0
        %1060 = vmatpush1.bf16.msra.mxu0 0
        %1061 = vmatprep.subr.bf16.mxu0 0
        %1062 = vmatpush1.bf16.msra.mxu0 0
        %1063 = vmatprep.subr.bf16.mxu0 0
        %1064 = vmatpush1.bf16.msra.mxu0 0
        %1065 = vmatprep.subr.bf16.mxu0 0
        %1066 = vmatpush1.bf16.msra.mxu0 0
        %1067 = vmatprep.subr.bf16.mxu0 0
        %1068 = vmatpush1.bf16.msra.mxu0 0
        %1069 = vmatprep.subr.bf16.mxu0 0
        %1070 = vmatpush1.bf16.msra.mxu0 0
        %1071 = vmatprep.subr.bf16.mxu0 0
        %1072 = vmatpush1.bf16.msra.mxu0 0
        %1073 = vmatprep.subr.bf16.mxu0 0
        %1074 = vmatpush1.bf16.msra.mxu0 0
        %1075 = vmatprep.subr.bf16.mxu0 0
        %1076 = vmatpush1.bf16.msra.mxu0 0
        %1077 = vmatprep.mubr.bf16.mxu0 0
        %1078 = vmatmul.mubr.bf16.gmra.mrb[0].mxu0 %v1040
        %v1079 = vpop.f32.mrb[0].mxu0
        %v1080 = vadd.f32 0.0, %v1079
        %v1081 = vpop.f32.mrb[0].mxu0
        %v1082 = vpop.f32.mrb[0].mxu0
        %v1083 = vpop.f32.mrb[0].mxu0
        %1084 = vdwg.mxu0
        %v1085 = vpack.c.bf16 %v1080, %v1080
        %1086 = vrot.lane.b32.xlu0 %v748, 104
        %v1087 = vpop.permute.xlu0 %1086
        %1088 = vrot.lane.b32.xlu0 %v749, 104
        %v1089 = vpop.permute.xlu0 %1088
        %v1091 = vsel %vm750, %v1087, 0
        %v1094 = vsel %vm750, %v1089, 0
        %1096 = vmatprep.subr.bf16.mxu0 0
        %1097 = vmatpush1.bf16.xpose.msra.mxu0 %v1094
        %1098 = vmatprep.subr.bf16.mxu0 0
        %1099 = vmatpush1.bf16.xpose.msra.mxu0 0
        %1100 = vmatprep.subr.bf16.mxu0 0
        %1101 = vmatpush1.bf16.xpose.msra.mxu0 0
        %1102 = vmatprep.subr.bf16.mxu0 0
        %1103 = vmatpush1.bf16.xpose.msra.mxu0 0
        %1104 = vmatprep.subr.bf16.mxu0 0
        %1105 = vmatpush1.bf16.xpose.msra.mxu0 0
        %1106 = vmatprep.subr.bf16.mxu0 0
        %1107 = vmatpush1.bf16.xpose.msra.mxu0 0
        %1108 = vmatprep.subr.bf16.mxu0 0
        %1109 = vmatpush1.bf16.xpose.msra.mxu0 0
        %1110 = vmatprep.subr.bf16.mxu0 0
        %1111 = vmatpush1.bf16.xpose.msra.mxu0 0
        %1112 = vmatprep.subr.bf16.mxu0 0
        %1113 = vmatpush1.bf16.xpose.msra.mxu0 0
        %1114 = vmatprep.subr.bf16.mxu0 0
        %1115 = vmatpush1.bf16.xpose.msra.mxu0 0
        %1116 = vmatprep.subr.bf16.mxu0 0
        %1117 = vmatpush1.bf16.xpose.msra.mxu0 0
        %1118 = vmatprep.subr.bf16.mxu0 0
        %1119 = vmatpush1.bf16.xpose.msra.mxu0 0
        %1120 = vmatprep.subr.bf16.mxu0 0
        %1121 = vmatpush1.bf16.xpose.msra.mxu0 0
        %1122 = vmatprep.subr.bf16.mxu0 0
        %1123 = vmatpush1.bf16.xpose.msra.mxu0 0
        %1124 = vmatprep.subr.bf16.mxu0 0
        %1125 = vmatpush1.bf16.xpose.msra.mxu0 0
        %1126 = vmatprep.subr.bf16.mxu0 0
        %1127 = vmatpush1.bf16.xpose.msra.mxu0 0
        %1128 = vmatprep.mubr.bf16.mxu0 0
        %1129 = vmatmul.mubr.bf16.gmra.mrb[0].mxu0 %v1091
        %v1130 = vpop.f32.mrb[0].mxu0
        %v1131 = vadd.f32 0.0, %v1130
        %v1132 = vpop.f32.mrb[0].mxu0
        %v1133 = vpop.f32.mrb[0].mxu0
        %v1134 = vpop.f32.mrb[0].mxu0
        %1135 = vdwg.mxu0
        %v1136 = vsel %vm750, %v1131, -inf
        %1137 = vmax.xlane.f32.xlu0 %v1136
        %v1138 = vpop.xlane.xlu0 %1137
        %v1139 = vsub.f32 %v1131, %v1138
        %v1140 = vmul.f32 %v1139, 1.442695
        %v1141 = vpow.pop %v1140
        %v1142 = vsel %vm750, %v1141, 0.0
        %1143 = vadd.xlane.f32.xlu0 %v1142
        %v1144 = vpop.xlane.xlu0 %1143
        %v1145 = vrcp.pop %v1144
        %v1146 = vmul.f32 %v1141, %v1145
        %v1147 = vadd.f32 %v1035, %v1146
        %v1148 = vpack.c.bf16 %v1146, %v1146
        %1149 = vrot.lane.b32.xlu0 %v749, 72
        %v1150 = vpop.permute.xlu0 %1149
        %v1152 = vsel %vm750, %v1148, 0
        %v1155 = vsel %vm816, %v1150, 0
        %1157 = vmatprep.subr.bf16.mxu0 0
        %1158 = vmatpush1.bf16.msra.mxu0 %v1155
        %1159 = vmatprep.subr.bf16.mxu0 0
        %1160 = vmatpush1.bf16.msra.mxu0 0
        %1161 = vmatprep.subr.bf16.mxu0 0
        %1162 = vmatpush1.bf16.msra.mxu0 0
        %1163 = vmatprep.subr.bf16.mxu0 0
        %1164 = vmatpush1.bf16.msra.mxu0 0
        %1165 = vmatprep.subr.bf16.mxu0 0
        %1166 = vmatpush1.bf16.msra.mxu0 0
        %1167 = vmatprep.subr.bf16.mxu0 0
        %1168 = vmatpush1.bf16.msra.mxu0 0
        %1169 = vmatprep.subr.bf16.mxu0 0
        %1170 = vmatpush1.bf16.msra.mxu0 0
        %1171 = vmatprep.subr.bf16.mxu0 0
        %1172 = vmatpush1.bf16.msra.mxu0 0
        %1173 = vmatprep.subr.bf16.mxu0 0
        %1174 = vmatpush1.bf16.msra.mxu0 0
        %1175 = vmatprep.subr.bf16.mxu0 0
        %1176 = vmatpush1.bf16.msra.mxu0 0
        %1177 = vmatprep.subr.bf16.mxu0 0
        %1178 = vmatpush1.bf16.msra.mxu0 0
        %1179 = vmatprep.subr.bf16.mxu0 0
        %1180 = vmatpush1.bf16.msra.mxu0 0
        %1181 = vmatprep.subr.bf16.mxu0 0
        %1182 = vmatpush1.bf16.msra.mxu0 0
        %1183 = vmatprep.subr.bf16.mxu0 0
        %1184 = vmatpush1.bf16.msra.mxu0 0
        %1185 = vmatprep.subr.bf16.mxu0 0
        %1186 = vmatpush1.bf16.msra.mxu0 0
        %1187 = vmatprep.subr.bf16.mxu0 0
        %1188 = vmatpush1.bf16.msra.mxu0 0
        %1189 = vmatprep.mubr.bf16.mxu0 0
        %1190 = vmatmul.mubr.bf16.gmra.mrb[0].mxu0 %v1152
        %v1191 = vpop.f32.mrb[0].mxu0
        %v1192 = vadd.f32 0.0, %v1191
        %v1193 = vpop.f32.mrb[0].mxu0
        %v1194 = vpop.f32.mrb[0].mxu0
        %v1195 = vpop.f32.mrb[0].mxu0
        %1196 = vdwg.mxu0
        %v1197 = vpack.c.bf16 %v1192, %v1192
        %1199 = vrot.lane.b32.xlu0 %v973, 8
        %v1200 = vpop.permute.xlu0 %1199
        %1202 = vrot.lane.b32.xlu0 %v1085, 16
        %v1203 = vpop.permute.xlu0 %1202
        %1205 = vrot.lane.b32.xlu0 %v1197, 24
        %v1206 = vpop.permute.xlu0 %1205
        %v1209 = vsel %vm750, %v860, %v1200
        %vm1210 = vcmask 130048
        %v1212 = vsel %vm1210, %v1209, %v1203
        %vm1213 = vcmask 195584
        %v1215 = vsel %vm1213, %v1212, %v1206
        %v1216 = vld [vmem:[%s6] sm:$0xf]
        %v1217 = vld [vmem:[%s6 + $0x4] sm:$0xf]
        %v1218 = vld [vmem:[%s6 + $0x8] sm:$0xf]
        %v1219 = vld [vmem:[%s6 + $0xc] sm:$0xf]
        %v1220 = vld [vmem:[%s7] sm:$0x1]
        %v1222 = vlaneseq
        %v1223 = vshrl.u32 %v1222, 7
        %v1224 = vsub.s32 0, %v1223
        %v1225 = vrot.slane %v1220, %v1224
        %v1231 = vunpack.c.l.b16 %v1216
        %v1232 = vunpack.c.l.b16 %v1217
        %v1233 = vunpack.c.l.b16 %v1218
        %v1234 = vunpack.c.l.b16 %v1219
        %v1235 = vpack.c.b16 %v1232, %v1231
        %v1236 = vpack.c.b16 %v1234, %v1233
        %v1239 = vsel %vm638, %v1215, 0
        %1241 = vmatprep.subr.bf16.mxu0 0
        %1242 = vmatpush1.bf16.msra.mxu0 %v1235
        %1243 = vmatprep.subr.bf16.mxu0 0
        %1244 = vmatpush1.bf16.msra.mxu0 %v1236
        %1245 = vmatprep.subr.bf16.mxu0 0
        %1246 = vmatpush1.bf16.msra.mxu0 0
        %1247 = vmatprep.subr.bf16.mxu0 0
        %1248 = vmatpush1.bf16.msra.mxu0 0
        %1249 = vmatprep.subr.bf16.mxu0 0
        %1250 = vmatpush1.bf16.msra.mxu0 0
        %1251 = vmatprep.subr.bf16.mxu0 0
        %1252 = vmatpush1.bf16.msra.mxu0 0
        %1253 = vmatprep.subr.bf16.mxu0 0
        %1254 = vmatpush1.bf16.msra.mxu0 0
        %1255 = vmatprep.subr.bf16.mxu0 0
        %1256 = vmatpush1.bf16.msra.mxu0 0
        %1257 = vmatprep.subr.bf16.mxu0 0
        %1258 = vmatpush1.bf16.msra.mxu0 0
        %1259 = vmatprep.subr.bf16.mxu0 0
        %1260 = vmatpush1.bf16.msra.mxu0 0
        %1261 = vmatprep.subr.bf16.mxu0 0
        %1262 = vmatpush1.bf16.msra.mxu0 0
        %1263 = vmatprep.subr.bf16.mxu0 0
        %1264 = vmatpush1.bf16.msra.mxu0 0
        %1265 = vmatprep.subr.bf16.mxu0 0
        %1266 = vmatpush1.bf16.msra.mxu0 0
        %1267 = vmatprep.subr.bf16.mxu0 0
        %1268 = vmatpush1.bf16.msra.mxu0 0
        %1269 = vmatprep.subr.bf16.mxu0 0
        %1270 = vmatpush1.bf16.msra.mxu0 0
        %1271 = vmatprep.subr.bf16.mxu0 0
        %1272 = vmatpush1.bf16.msra.mxu0 0
        %1273 = vmatprep.mubr.bf16.mxu0 0
        %1274 = vmatmul.mubr.bf16.gmra.mrb[0].mxu0 %v1239
        %v1275 = vpop.f32.mrb[0].mxu0
        %v1276 = vadd.f32 %v1225, %v1275
        %v1277 = vpop.f32.mrb[0].mxu0
        %v1278 = vpop.f32.mrb[0].mxu0
        %v1279 = vpop.f32.mrb[0].mxu0
        %1280 = vdwg.mxu0
        %v1281 = vpack.c.bf16 %v1276, %v1276
        %v1282 = vld [vmem:[%s8] sm:$0xf]
        %v1283 = vld [vmem:[%s8 + $0x4] sm:$0xf]
        %v1284 = vld [vmem:[%s8 + $0x8] sm:$0xf]
        %v1285 = vld [vmem:[%s8 + $0xc] sm:$0xf]
        %v1286 = vld [vmem:[%s9] sm:$0x1]
        %v1288 = vlaneseq
        %v1289 = vshrl.u32 %v1288, 7
        %v1290 = vsub.s32 0, %v1289
        %v1291 = vrot.slane %v1286, %v1290
        %v1297 = vunpack.c.l.b16 %v1282
        %v1298 = vunpack.c.l.b16 %v1283
        %v1299 = vunpack.c.l.b16 %v1284
        %v1300 = vunpack.c.l.b16 %v1285
        %v1301 = vpack.c.b16 %v1298, %v1297
        %v1302 = vpack.c.b16 %v1300, %v1299
        %v1306 = vsel %vm638, %v1281, 0
        %1308 = vmatprep.subr.bf16.mxu0 0
        %1309 = vmatpush1.bf16.msra.mxu0 %v1301
        %1310 = vmatprep.subr.bf16.mxu0 0
        %1311 = vmatpush1.bf16.msra.mxu0 %v1302
        %1312 = vmatprep.subr.bf16.mxu0 0
        %1313 = vmatpush1.bf16.msra.mxu0 0
        %1314 = vmatprep.subr.bf16.mxu0 0
        %1315 = vmatpush1.bf16.msra.mxu0 0
        %1316 = vmatprep.subr.bf16.mxu0 0
        %1317 = vmatpush1.bf16.msra.mxu0 0
        %1318 = vmatprep.subr.bf16.mxu0 0
        %1319 = vmatpush1.bf16.msra.mxu0 0
        %1320 = vmatprep.subr.bf16.mxu0 0
        %1321 = vmatpush1.bf16.msra.mxu0 0
        %1322 = vmatprep.subr.bf16.mxu0 0
        %1323 = vmatpush1.bf16.msra.mxu0 0
        %1324 = vmatprep.subr.bf16.mxu0 0
        %1325 = vmatpush1.bf16.msra.mxu0 0
        %1326 = vmatprep.subr.bf16.mxu0 0
        %1327 = vmatpush1.bf16.msra.mxu0 0
        %1328 = vmatprep.subr.bf16.mxu0 0
        %1329 = vmatpush1.bf16.msra.mxu0 0
        %1330 = vmatprep.subr.bf16.mxu0 0
        %1331 = vmatpush1.bf16.msra.mxu0 0
        %1332 = vmatprep.subr.bf16.mxu0 0
        %1333 = vmatpush1.bf16.msra.mxu0 0
        %1334 = vmatprep.subr.bf16.mxu0 0
        %1335 = vmatpush1.bf16.msra.mxu0 0
        %1336 = vmatprep.subr.bf16.mxu0 0
        %1337 = vmatpush1.bf16.msra.mxu0 0
        %1338 = vmatprep.subr.bf16.mxu0 0
        %1339 = vmatpush1.bf16.msra.mxu0 0
        %1340 = vmatprep.mubr.bf16.mxu0 0
        %1341 = vmatmul.mubr.bf16.gmra.mrb[0].mxu0 %v1306
        %v1342 = vpop.f32.mrb[0].mxu0
        %v1343 = vadd.f32 %v1291, %v1342
        %v1344 = vpop.f32.mrb[0].mxu0
        %v1345 = vpop.f32.mrb[0].mxu0
        %v1346 = vpop.f32.mrb[0].mxu0
        %1347 = vdwg.mxu0
        %v1348 = vmax.f32 %v1343, 0.0
        %v1349 = vpack.c.bf16 %v1348, %v1348
        %v1350 = vld [vmem:[%s10] sm:$0xf]
        %v1351 = vld [vmem:[%s10 + $0x4] sm:$0xf]
        %v1352 = vld [vmem:[%s10 + $0x8] sm:$0xf]
        %v1353 = vld [vmem:[%s10 + $0xc] sm:$0xf]
        %v1354 = vld [vmem:[%s10 + $0x10] sm:$0xf]
        %v1355 = vld [vmem:[%s10 + $0x14] sm:$0xf]
        %v1356 = vld [vmem:[%s10 + $0x18] sm:$0xf]
        %v1357 = vld [vmem:[%s10 + $0x1c] sm:$0xf]
        %v1358 = vld [vmem:[%s11] sm:$0x1]
        %v1360 = vlaneseq
        %v1361 = vshrl.u32 %v1360, 7
        %v1362 = vsub.s32 0, %v1361
        %v1363 = vrot.slane %v1358, %v1362
        %v1373 = vunpack.c.l.b16 %v1350
        %v1374 = vunpack.c.l.b16 %v1351
        %v1375 = vunpack.c.l.b16 %v1352
        %v1376 = vunpack.c.l.b16 %v1353
        %v1377 = vunpack.c.l.b16 %v1354
        %v1378 = vunpack.c.l.b16 %v1355
        %v1379 = vunpack.c.l.b16 %v1356
        %v1380 = vunpack.c.l.b16 %v1357
        %v1381 = vpack.c.b16 %v1374, %v1373
        %v1382 = vpack.c.b16 %v1376, %v1375
        %v1383 = vpack.c.b16 %v1378, %v1377
        %v1384 = vpack.c.b16 %v1380, %v1379
        %vm1389 = vcmask 523264
        %v1391 = vsel %vm1389, %v1349, 0
        %1393 = vmatprep.subr.bf16.mxu0 0
        %1394 = vmatpush1.bf16.msra.mxu0 %v1381
        %1395 = vmatprep.subr.bf16.mxu0 0
        %1396 = vmatpush1.bf16.msra.mxu0 %v1382
        %1397 = vmatprep.subr.bf16.mxu0 0
        %1398 = vmatpush1.bf16.msra.mxu0 %v1383
        %1399 = vmatprep.subr.bf16.mxu0 0
        %1400 = vmatpush1.bf16.msra.mxu0 %v1384
        %1401 = vmatprep.subr.bf16.mxu0 0
        %1402 = vmatpush1.bf16.msra.mxu0 0
        %1403 = vmatprep.subr.bf16.mxu0 0
        %1404 = vmatpush1.bf16.msra.mxu0 0
        %1405 = vmatprep.subr.bf16.mxu0 0
        %1406 = vmatpush1.bf16.msra.mxu0 0
        %1407 = vmatprep.subr.bf16.mxu0 0
        %1408 = vmatpush1.bf16.msra.mxu0 0
        %1409 = vmatprep.subr.bf16.mxu0 0
        %1410 = vmatpush1.bf16.msra.mxu0 0
        %1411 = vmatprep.subr.bf16.mxu0 0
        %1412 = vmatpush1.bf16.msra.mxu0 0
        %1413 = vmatprep.subr.bf16.mxu0 0
        %1414 = vmatpush1.bf16.msra.mxu0 0
        %1415 = vmatprep.subr.bf16.mxu0 0
        %1416 = vmatpush1.bf16.msra.mxu0 0
        %1417 = vmatprep.subr.bf16.mxu0 0
        %1418 = vmatpush1.bf16.msra.mxu0 0
        %1419 = vmatprep.subr.bf16.mxu0 0
        %1420 = vmatpush1.bf16.msra.mxu0 0
        %1421 = vmatprep.subr.bf16.mxu0 0
        %1422 = vmatpush1.bf16.msra.mxu0 0
        %1423 = vmatprep.subr.bf16.mxu0 0
        %1424 = vmatpush1.bf16.msra.mxu0 0
        %1425 = vmatprep.mubr.bf16.mxu0 0
        %1426 = vmatmul.mubr.bf16.gmra.mrb[0].mxu0 %v1391
        %v1427 = vpop.f32.mrb[0].mxu0
        %v1428 = vadd.f32 %v1363, %v1427
        %v1429 = vpop.f32.mrb[0].mxu0
        %v1430 = vpop.f32.mrb[0].mxu0
        %v1431 = vpop.f32.mrb[0].mxu0
        %1432 = vdwg.mxu0
        %v1433 = vld [vmem:[%s12] sm:$0xf]
        %v1434 = vld [vmem:[%s12 + $0x4] sm:$0xf]
        %v1435 = vld [vmem:[%s12 + $0x8] sm:$0xf]
        %v1436 = vld [vmem:[%s12 + $0xc] sm:$0xf]
        %v1437 = vld [vmem:[%s13] sm:$0x1]
        %v1439 = vlaneseq
        %v1440 = vshrl.u32 %v1439, 7
        %v1441 = vsub.s32 0, %v1440
        %v1442 = vrot.slane %v1437, %v1441
        %v1448 = vunpack.c.l.b16 %v1433
        %v1449 = vunpack.c.l.b16 %v1434
        %v1450 = vunpack.c.l.b16 %v1435
        %v1451 = vunpack.c.l.b16 %v1436
        %v1452 = vpack.c.b16 %v1449, %v1448
        %v1453 = vpack.c.b16 %v1451, %v1450
        %1456 = vmatprep.subr.bf16.mxu0 0
        %1457 = vmatpush1.bf16.msra.mxu0 %v1452
        %1458 = vmatprep.subr.bf16.mxu0 0
        %1459 = vmatpush1.bf16.msra.mxu0 %v1453
        %1460 = vmatprep.subr.bf16.mxu0 0
        %1461 = vmatpush1.bf16.msra.mxu0 0
        %1462 = vmatprep.subr.bf16.mxu0 0
        %1463 = vmatpush1.bf16.msra.mxu0 0
        %1464 = vmatprep.subr.bf16.mxu0 0
        %1465 = vmatpush1.bf16.msra.mxu0 0
        %1466 = vmatprep.subr.bf16.mxu0 0
        %1467 = vmatpush1.bf16.msra.mxu0 0
        %1468 = vmatprep.subr.bf16.mxu0 0
        %1469 = vmatpush1.bf16.msra.mxu0 0
        %1470 = vmatprep.subr.bf16.mxu0 0
        %1471 = vmatpush1.bf16.msra.mxu0 0
        %1472 = vmatprep.subr.bf16.mxu0 0
        %1473 = vmatpush1.bf16.msra.mxu0 0
        %1474 = vmatprep.subr.bf16.mxu0 0
        %1475 = vmatpush1.bf16.msra.mxu0 0
        %1476 = vmatprep.subr.bf16.mxu0 0
        %1477 = vmatpush1.bf16.msra.mxu0 0
        %1478 = vmatprep.subr.bf16.mxu0 0
        %1479 = vmatpush1.bf16.msra.mxu0 0
        %1480 = vmatprep.subr.bf16.mxu0 0
        %1481 = vmatpush1.bf16.msra.mxu0 0
        %1482 = vmatprep.subr.bf16.mxu0 0
        %1483 = vmatpush1.bf16.msra.mxu0 0
        %1484 = vmatprep.subr.bf16.mxu0 0
        %1485 = vmatpush1.bf16.msra.mxu0 0
        %1486 = vmatprep.subr.bf16.mxu0 0
        %1487 = vmatpush1.bf16.msra.mxu0 0
        %1488 = vmatprep.mubr.bf16.mxu0 0
        %1489 = vmatmul.mubr.bf16.gmra.mrb[0].mxu0 %v640
        %v1490 = vpop.f32.mrb[0].mxu0
        %v1491 = vadd.f32 %v1442, %v1490
        %v1492 = vpop.f32.mrb[0].mxu0
        %v1493 = vpop.f32.mrb[0].mxu0
        %v1494 = vpop.f32.mrb[0].mxu0
        %1495 = vdwg.mxu0
        %v1496 = vmax.f32 %v1491, 0.0
        %v1497 = vpack.c.bf16 %v1496, %v1496
        %v1498 = vld [vmem:[%s14] sm:$0xf]
        %v1499 = vld [vmem:[%s14 + $0x4] sm:$0xf]
        %v1500 = vld [vmem:[%s14 + $0x8] sm:$0xf]
        %v1501 = vld [vmem:[%s14 + $0xc] sm:$0xf]
        %v1502 = vld [vmem:[%s14 + $0x10] sm:$0xf]
        %v1503 = vld [vmem:[%s14 + $0x14] sm:$0xf]
        %v1504 = vld [vmem:[%s14 + $0x18] sm:$0xf]
        %v1505 = vld [vmem:[%s14 + $0x1c] sm:$0xf]
        %v1506 = vld [vmem:[%s15] sm:$0x1]
        %v1508 = vlaneseq
        %v1509 = vshrl.u32 %v1508, 7
        %v1510 = vsub.s32 0, %v1509
        %v1511 = vrot.slane %v1506, %v1510
        %v1521 = vunpack.c.l.b16 %v1498
        %v1522 = vunpack.c.l.b16 %v1499
        %v1523 = vunpack.c.l.b16 %v1500
        %v1524 = vunpack.c.l.b16 %v1501
        %v1525 = vunpack.c.l.b16 %v1502
        %v1526 = vunpack.c.l.b16 %v1503
        %v1527 = vunpack.c.l.b16 %v1504
        %v1528 = vunpack.c.l.b16 %v1505
        %v1529 = vpack.c.b16 %v1522, %v1521
        %v1530 = vpack.c.b16 %v1524, %v1523
        %v1531 = vpack.c.b16 %v1526, %v1525
        %v1532 = vpack.c.b16 %v1528, %v1527
        %v1538 = vsel %vm1389, %v1497, 0
        %1540 = vmatprep.subr.bf16.mxu0 0
        %1541 = vmatpush1.bf16.msra.mxu0 %v1529
        %1542 = vmatprep.subr.bf16.mxu0 0
        %1543 = vmatpush1.bf16.msra.mxu0 %v1530
        %1544 = vmatprep.subr.bf16.mxu0 0
        %1545 = vmatpush1.bf16.msra.mxu0 %v1531
        %1546 = vmatprep.subr.bf16.mxu0 0
        %1547 = vmatpush1.bf16.msra.mxu0 %v1532
        %1548 = vmatprep.subr.bf16.mxu0 0
        %1549 = vmatpush1.bf16.msra.mxu0 0
        %1550 = vmatprep.subr.bf16.mxu0 0
        %1551 = vmatpush1.bf16.msra.mxu0 0
        %1552 = vmatprep.subr.bf16.mxu0 0
        %1553 = vmatpush1.bf16.msra.mxu0 0
        %1554 = vmatprep.subr.bf16.mxu0 0
        %1555 = vmatpush1.bf16.msra.mxu0 0
        %1556 = vmatprep.subr.bf16.mxu0 0
        %1557 = vmatpush1.bf16.msra.mxu0 0
        %1558 = vmatprep.subr.bf16.mxu0 0
        %1559 = vmatpush1.bf16.msra.mxu0 0
        %1560 = vmatprep.subr.bf16.mxu0 0
        %1561 = vmatpush1.bf16.msra.mxu0 0
        %1562 = vmatprep.subr.bf16.mxu0 0
        %1563 = vmatpush1.bf16.msra.mxu0 0
        %1564 = vmatprep.subr.bf16.mxu0 0
        %1565 = vmatpush1.bf16.msra.mxu0 0
        %1566 = vmatprep.subr.bf16.mxu0 0
        %1567 = vmatpush1.bf16.msra.mxu0 0
        %1568 = vmatprep.subr.bf16.mxu0 0
        %1569 = vmatpush1.bf16.msra.mxu0 0
        %1570 = vmatprep.subr.bf16.mxu0 0
        %1571 = vmatpush1.bf16.msra.mxu0 0
        %1572 = vmatprep.mubr.bf16.mxu0 0
        %1573 = vmatmul.mubr.bf16.gmra.mrb[0].mxu0 %v1538
        %v1574 = vpop.f32.mrb[0].mxu0
        %v1575 = vadd.f32 %v1511, %v1574
        %v1576 = vpop.f32.mrb[0].mxu0
        %v1577 = vpop.f32.mrb[0].mxu0
        %v1578 = vpop.f32.mrb[0].mxu0
        %1579 = vdwg.mxu0
        %1581 = vrot.lane.b32.xlu0 %v1575, 32
        %v1582 = vpop.permute.xlu0 %1581
        %v1584 = vsel %vm638, %v1428, %v1582
        %v1585 = vsel %vm1389, %v1584, 0.0
        %1586 = vst [vmem:[%s604] sm:$0xff] %v1585
        %v1587 = vmul.f32 %v1147, 0.25
        %v1588 = vsel %vm750, %v1587, 0.0
        %1589 = vst [vmem:[%s611] sm:$0xff] %v1588
        %s1590 = sand.u32 %s395, 1
        %s1591 = scalar_lea.sflag [#allocation4], %s1590
        %s1592 = sand.u32 %s395, 1
        %s1593 = smul.addr %s1592, 8
        %s1594 = scalar_lea.vmem [#allocation7], %s1593
        %s1595 = sand.u32 %s421, 1
        %s1596 = scalar_lea.sflag [#allocation9], %s1595
        %s1597 = sand.u32 %s421, 1
        %s1598 = smul.addr %s1597, 8
        %s1599 = scalar_lea.vmem [#allocation8], %s1598
        // Predicated region
        $region93: #{tpu_custom_call.1} parent=83 // pred_check
          %p1600 = pneg %p405
        $region94: #{tpu_custom_call.1} parent=83 // pred_check_branch
          %1602 = sbr.rel (%p1600) target = $region96
        $region95: #{tpu_custom_call.1} parent=83 // pred_region
          %s1604 = ssub.s32 128, 128
          %1605 = vsyncadd %s1591, %s1604
          %s1606 = smul.addr %s41, 128
          %s1607 = scalar_lea.hbm %s16, %s1606
          %s1609 = sshll.u32 %s1594, 4
          %s1610 = int_to_ptr.vmem [resolvable:$true] %s1609
          %1612 = dma.vmem_to_hbm [thread:$0]  %s1610, 128, %s1607, %s1591
        $region96: #{tpu_custom_call.1} parent=83 // pred_fallthru
          _
        // Predicated region
        $region97: #{tpu_custom_call.1} parent=83 // pred_check
          %p1613 = pneg %p431
        $region98: #{tpu_custom_call.1} parent=83 // pred_check_branch
          %1615 = sbr.rel (%p1613) target = $region100
        $region99: #{tpu_custom_call.1} parent=83 // pred_region
          %s1617 = ssub.s32 128, 128
          %1618 = vsyncadd %s1596, %s1617
          %s1619 = smul.addr %s41, 128
          %s1620 = scalar_lea.hbm %s17, %s1619
          %s1622 = sshll.u32 %s1599, 4
          %s1623 = int_to_ptr.vmem [resolvable:$true] %s1622
          %1625 = dma.vmem_to_hbm [thread:$0]  %s1623, 128, %s1620, %s1596
        $region100: #{tpu_custom_call.1} parent=83 // pred_fallthru
          _
      $region84: #{tpu_custom_call.1} parent=5 // pred_fallthru
        _
      %p1626 = scmp.le.s32.totalorder 2, %s36
      // Predicated region
      $region101: #{tpu_custom_call.1} parent=5 // pred_check
        %p1627 = pneg %p1626
      $region102: #{tpu_custom_call.1} parent=5 // pred_check_branch
        %1629 = sbr.rel (%p1627) target = $region104
      $region103: #{tpu_custom_call.1} parent=5 // pred_region
        %s1630 = ssub.s32 %s36, 2
        // Predicated region
        $region105: #{tpu_custom_call.1} parent=103 // pred_check
          %p1631 = pneg %p411
        $region106: #{tpu_custom_call.1} parent=103 // pred_check_branch
          %1633 = sbr.rel (%p1631) target = $region108
        $region107: #{tpu_custom_call.1} parent=103 // pred_region
          %s1634 = sand.u32 %s396, 1
          %s1635 = scalar_lea.sflag [#allocation4], %s1634
          %s1636 = sand.u32 %s396, 1
          %s1637 = smul.addr %s1636, 8
          %s1638 = scalar_lea.vmem [#allocation7], %s1637
          %1639 = dma.done %s1635, 128
        $region108: #{tpu_custom_call.1} parent=103 // pred_fallthru
          _
        // Predicated region
        $region109: #{tpu_custom_call.1} parent=103 // pred_check
          %p1640 = pneg %p437
        $region110: #{tpu_custom_call.1} parent=103 // pred_check_branch
          %1642 = sbr.rel (%p1640) target = $region112
        $region111: #{tpu_custom_call.1} parent=103 // pred_region
          %s1643 = sand.u32 %s422, 1
          %s1644 = scalar_lea.sflag [#allocation9], %s1643
          %s1645 = sand.u32 %s422, 1
          %s1646 = smul.addr %s1645, 8
          %s1647 = scalar_lea.vmem [#allocation8], %s1646
          %1648 = dma.done %s1644, 128
        $region112: #{tpu_custom_call.1} parent=103 // pred_fallthru
          _
      $region104: #{tpu_custom_call.1} parent=5 // pred_fallthru
        _
    $region6: #{tpu_custom_call.1} parent=1 // loop_footer
      %s40 = sadd.s32 1, %s36
    $region7: #{tpu_custom_call.1} parent=1 // loop_footer_branch
      %35 = sbr.rel target = $region3
    $region8: #{tpu_custom_call.1} parent=1 // loop_exit
      _
    %1649 = vsyncpa [#allocation3], 1
    %s1650 = scalar_lea.sflag [#allocation3], 1
    %1651 = vsyncpa %s1650, 1
    %1652 = vsyncpa [#allocation6], 1
    %s1653 = scalar_lea.sflag [#allocation6], 1
    %1654 = vsyncpa %s1653, 1
    %1655 = vsyncpa [#allocation4], 1
    %s1656 = scalar_lea.sflag [#allocation4], 1
    %1657 = vsyncpa %s1656, 1
    %1658 = vsyncpa [#allocation9], 1
    %s1659 = scalar_lea.sflag [#allocation9], 1
    %1660 = vsyncpa %s1659, 1

</llo_original>
